<compile_context>
chip_gen: v5e
topology: v5e:2x2
jax: 0.10.0
libtpu: 0.0.40
codegen_flags: <defaults>
</compile_context>

<pallas_src>
import functools

import jax
import jax.numpy as jnp
from jax.experimental import pallas as pl
from jax.experimental.pallas import tpu as pltpu


# --------------------------------------------------------------------------- #
# Filter construction (rotation-equivariant filter bank)
# --------------------------------------------------------------------------- #
def build_rre_filters(w, g_bias, c2, c1, g, k):
    """stack([rot90(w, r) for r in range(g)], dim=1) + g_bias -> (c2*g, c1, k, k)."""
    rotated = jnp.stack([jnp.rot90(w, r, axes=(-2, -1)) for r in range(g)], axis=1)
    filt = rotated + g_bias                       # g_bias (c2, g, 1, k, k) broadcasts over c1
    return filt.reshape(c2 * g, c1, k, k)         # same channel order as torch .view


# --------------------------------------------------------------------------- #
# Pallas kernels
# --------------------------------------------------------------------------- #
def _rrl_conv_kernel_s1(x_ref, w_ref, o_ref, *, C1, COUT, K, Wp, Ho, Wo):
    """Stride-1 dense conv for one batch element, lane-dense formulation.

    x_ref: (1, C1, Lp)      flattened padded image rows (row pitch = Wp), VMEM
    w_ref: (COUT, C1*K*K)   filter taps, tap index = ci*K*K + ki*K + kj, VMEM
    o_ref: (1, COUT, Ho*Wo) lane-dense output block (Ho*Wo multiple of 128), VMEM
    """
    PLEN = Ho * Wp                              # over-computed row-pitch accumulation length
    xv = x_ref[0].astype(jnp.float32)           # (C1, Lp)   hoisted load + cast
    wv = w_ref[...].astype(jnp.float32)         # (COUT, T)  hoisted load + cast

    # Multiple accumulators (one per kj phase, capped) -> shorter per-vreg dependence
    # chains, more ILP for the 4 VALU slots.  Summed once after the tap loop.
    NACC = min(K, 3)
    accs = [jnp.zeros((COUT, PLEN), jnp.float32) for _ in range(NACC)]

    for ci in range(C1):
        for ki in range(K):
            base = ki * Wp                      # static -> alignment known at compile time
            # One contiguous slab per (ci, ki), reused by all kj taps below.
            slab = xv[ci, base:base + PLEN + K - 1]          # (PLEN + K - 1,)
            for kj in range(K):
                t = (ci * K + ki) * K + kj
                patch = slab[kj:kj + PLEN]                   # static contiguous lane slice
                # broadcast outer-product accumulate: (COUT,1)*(1,PLEN) -> (COUT,PLEN)
                accs[kj % NACC] = accs[kj % NACC] + wv[:, t:t + 1] * patch[None, :]

    acc = accs[0]
    for a in range(1, NACC):
        acc = acc + accs[a]

    # Crop the over-computed columns (Wp -> Wo) once at the end with per-row stores.
    # The hot loop above is fully lane-dense; the output HBM block itself is lane-dense
    # (minor dim = Ho*Wo).  In-kernel cropping keeps HBM output traffic minimal (no
    # wrapper-side re-read of an over-wide slab), at the cost of Ho small masked stores.
    out_f = acc.astype(o_ref.dtype)
    for oh in range(Ho):
        o_ref[0, :, oh * Wo:(oh + 1) * Wo] = out_f[:, oh * Wp: oh * Wp + Wo]


def _rrl_conv_kernel_generic(x_ref, w_ref, o_ref, *, C1, COUT, K, S, Ho, Wo):
    """Generic-stride dense conv for one batch element (s >= 1 fallback path).

    x_ref: (1, C1, Hp, Wp); w_ref: (COUT, C1*K*K); o_ref: (1, COUT, Ho, Wo)
    """
    # TODO(synk): generic-stride path keeps Wo-wide (lane-sparse) tiles; only the s==1
    # path uses the lane-dense flattened layout.
    xv = x_ref[0].astype(jnp.float32)           # (C1, Hp, Wp)
    wv = w_ref[...].astype(jnp.float32)         # (COUT, T)

    acc = jnp.zeros((COUT, Ho, Wo), jnp.float32)
    t = 0
    for ci in range(C1):
        for ki in range(K):
            for kj in range(K):
                patch = jax.lax.slice(
                    xv,
                    (ci, ki, kj),
                    (ci + 1, ki + S * (Ho - 1) + 1, kj + S * (Wo - 1) + 1),
                    (1, S, S),
                )                                # (1, Ho, Wo)
                acc = acc + wv[:, t][:, None, None] * patch
                t += 1
    o_ref[0] = acc.astype(o_ref.dtype)


# --------------------------------------------------------------------------- #
# Wrapper
# --------------------------------------------------------------------------- #
def rrl_conv(x, w, g_bias, *, k, s, p, g):
    """Forward pass of RRLConv: dense conv2d with the rotated filter bank."""
    B, c1, H, W = x.shape
    c2 = w.shape[0]
    cout = c2 * g
    T = c1 * k * k

    filt = build_rre_filters(w, g_bias, c2, c1, g, k)    # (cout, c1, k, k)
    w2d = filt.reshape(cout, T)                          # tap order: ci, ki, kj

    Hp, Wp = H + 2 * p, W + 2 * p
    Ho = (Hp - k) // s + 1
    Wo = (Wp - k) // s + 1

    if s == 1:
        # Single wrapper-side pad: spatial padding plus `extra` bottom rows so every
        # flat tap slab (max end = Hp*Wp + k - 1) stays in bounds.  All reshapes below
        # are free (row-major views).
        extra = (k - 1 + Wp - 1) // Wp if k > 1 else 0
        x_pad = jnp.pad(x, ((0, 0), (0, 0), (p, p + extra), (p, p)))
        Lp = (Hp + extra) * Wp
        x_flat = x_pad.reshape(B, c1, Lp)

        kernel = functools.partial(
            _rrl_conv_kernel_s1, C1=c1, COUT=cout, K=k, Wp=Wp, Ho=Ho, Wo=Wo)

        out_flat = pl.pallas_call(
            kernel,
            out_shape=jax.ShapeDtypeStruct((B, cout, Ho * Wo), x.dtype),
            grid_spec=pltpu.PrefetchScalarGridSpec(
                num_scalar_prefetch=0,
                grid=(B,),
                in_specs=[
                    pl.BlockSpec((1, c1, Lp), lambda b: (b, 0, 0)),
                    pl.BlockSpec((cout, T), lambda b: (0, 0)),
                ],
                out_specs=pl.BlockSpec((1, cout, Ho * Wo), lambda b: (b, 0, 0)),
            ),
            compiler_params=pltpu.CompilerParams(
                dimension_semantics=("parallel",)),
        )(x_flat, w2d)

        return out_flat.reshape(B, c2, g, Ho, Wo)        # free view, caller's layout

    # Generic stride fallback.
    x_pad = jnp.pad(x, ((0, 0), (0, 0), (p, p), (p, p)))
    kernel = functools.partial(
        _rrl_conv_kernel_generic, C1=c1, COUT=cout, K=k, S=s, Ho=Ho, Wo=Wo)

    out = pl.pallas_call(
        kernel,
        out_shape=jax.ShapeDtypeStruct((B, cout, Ho, Wo), x.dtype),
        grid_spec=pltpu.PrefetchScalarGridSpec(
            num_scalar_prefetch=0,
            grid=(B,),
            in_specs=[
                pl.BlockSpec((1, c1, Hp, Wp), lambda b: (b, 0, 0, 0)),
                pl.BlockSpec((cout, T), lambda b: (0, 0)),
            ],
            out_specs=pl.BlockSpec((1, cout, Ho, Wo), lambda b: (b, 0, 0, 0)),
        ),
        compiler_params=pltpu.CompilerParams(
            dimension_semantics=("parallel",)),
    )(x_pad, w2d)

    return out.reshape(B, c2, g, Ho, Wo)


# --------------------------------------------------------------------------- #
# Pure-JAX reference (independent rotation construction to cross-check
# the torch.rot90 convention used by build_rre_filters).
# --------------------------------------------------------------------------- #
def _rot90_once(x):
    # torch.rot90(x, 1, dims=[-2, -1]) == transpose(flip(x, -1)) on the last two axes.
    return jnp.swapaxes(jnp.flip(x, axis=-1), -2, -1)


def _build_filters_reference(w, g_bias, c2, c1, g, k):
    rots, cur = [], w
    for _ in range(g):
        rots.append(cur)
        cur = _rot90_once(cur)
    filt = jnp.stack(rots, axis=1) + g_bias
    return filt.reshape(c2 * g, c1, k, k)


def _reference(x, w, g_bias, *, k, s, p, g):
    B, c1, H, W = x.shape
    c2 = w.shape[0]
    filt = _build_filters_reference(w, g_bias, c2, c1, g, k)
    out = jax.lax.conv_general_dilated(
        x, filt,
        window_strides=(s, s),
        padding=((p, p), (p, p)),
        dimension_numbers=("NCHW", "OIHW", "NCHW"),
        precision=jax.lax.Precision.HIGHEST,
    )
    return out.reshape(B, c2, g, out.shape[-2], out.shape[-1])


# --------------------------------------------------------------------------- #
# Example / self-test
# --------------------------------------------------------------------------- #
if __name__ == "__main__":
    # Module config: RRLConv(c1=4, c2=4, k=3, s=1, p=1), g_order=4, rre=True
    c1, c2, g, k, s, p = 4, 4, 4, 3, 1, 1
    B, H, W = 2, 16, 16

    key = jax.random.PRNGKey(0)
    kw, kb, kx = jax.random.split(key, 3)

    # kaiming_uniform_(a=sqrt(5)) on (c2, c1, k, k): bound = 1/sqrt(fan_in) = 1/sqrt(c1*k*k)
    fan_in = c1 * k * k
    bound = 1.0 / (fan_in ** 0.5)
    w = jax.random.uniform(kw, (c2, c1, k, k), jnp.float32, -bound, bound)
    # params['std'] == 0 leaves g_bias zero at init; use small nonzero values here so
    # the RRE bias-add path of the forward pass is actually exercised/validated.
    g_bias = 0.05 * jax.random.normal(kb, (c2, g, 1, k, k), jnp.float32)

    x = jax.random.normal(kx, (B, c1, H, W), jnp.float32)

    rrl = jax.jit(functools.partial(rrl_conv, k=k, s=s, p=p, g=g))
    out = rrl(x, w, g_bias)
    out = jax.block_until_ready(out)

    ref = _reference(x, w, g_bias, k=k, s=s, p=p, g=g)
    assert out.shape == ref.shape == (B, c2, g, H, W), (out.shape, ref.shape)
    assert jnp.allclose(out, ref, atol=1e-5, rtol=1e-5), float(jnp.abs(out - ref).max())

    print("KERNEL_OK")
</pallas_src>

<mosaic_0001>
module attributes {stable_mosaic.version = 11 : i64} {
  func.func @_rrl_conv_kernel_s1(%arg0: i32, %arg1: memref<1x4x342xf32, #tpu.memory_space<vmem>>, %arg2: memref<16x36xf32, #tpu.memory_space<vmem>>, %arg3: memref<1x16x256xf32, #tpu.memory_space<vmem>>) attributes {dimension_semantics = [#tpu.dimension_semantics<parallel>], iteration_bounds = array<i64: 2>, scalar_prefetch = 0 : i64, scratch_operands = 0 : i64, tpu.core_type = #tpu.core_type<tc>, window_params = [{transform_indices = @transform_0, window_bounds = array<i64: 1, 4, 342>}, {pipeline_mode = #tpu.pipeline_mode<synchronous>, transform_indices = @transform_1, window_bounds = array<i64: 16, 36>}, {transform_indices = @transform_2, window_bounds = array<i64: 1, 16, 256>}]} {
    %c0 = arith.constant 0 : index
    %c0_0 = arith.constant 0 : index
    %c0_1 = arith.constant 0 : index
    %0 = vector.load %arg1[%c0, %c0_0, %c0_1] : memref<1x4x342xf32, #tpu.memory_space<vmem>>, vector<1x4x342xf32>
    %1 = vector.shape_cast %0 : vector<1x4x342xf32> to vector<4x342xf32>
    %c0_2 = arith.constant 0 : index
    %c0_3 = arith.constant 0 : index
    %2 = vector.load %arg2[%c0_2, %c0_3] : memref<16x36xf32, #tpu.memory_space<vmem>>, vector<16x36xf32>
    %cst = arith.constant 0.000000e+00 : f32
    %3 = vector.broadcast %cst : f32 to vector<16x288xf32>
    %cst_4 = arith.constant 0.000000e+00 : f32
    %4 = vector.broadcast %cst_4 : f32 to vector<16x288xf32>
    %cst_5 = arith.constant 0.000000e+00 : f32
    %5 = vector.broadcast %cst_5 : f32 to vector<16x288xf32>
    %6 = vector.extract_strided_slice %1 {offsets = [0, 0], sizes = [1, 290], strides = [1, 1]} : vector<4x342xf32> to vector<1x290xf32>
    %7 = vector.shape_cast %6 : vector<1x290xf32> to vector<290xf32>
    %8 = vector.extract_strided_slice %7 {offsets = [0], sizes = [288], strides = [1]} : vector<290xf32> to vector<288xf32>
    %9 = vector.extract_strided_slice %2 {offsets = [0, 0], sizes = [16, 1], strides = [1, 1]} : vector<16x36xf32> to vector<16x1xf32>
    %10 = vector.shape_cast %8 : vector<288xf32> to vector<1x288xf32>
    %11 = vector.broadcast %9 : vector<16x1xf32> to vector<16x288xf32>
    %12 = vector.broadcast %10 : vector<1x288xf32> to vector<16x288xf32>
    %13 = arith.mulf %11, %12 : vector<16x288xf32>
    %14 = arith.addf %3, %13 : vector<16x288xf32>
    %15 = vector.extract_strided_slice %7 {offsets = [1], sizes = [288], strides = [1]} : vector<290xf32> to vector<288xf32>
    %16 = vector.extract_strided_slice %2 {offsets = [0, 1], sizes = [16, 1], strides = [1, 1]} : vector<16x36xf32> to vector<16x1xf32>
    %17 = vector.shape_cast %15 : vector<288xf32> to vector<1x288xf32>
    %18 = vector.broadcast %16 : vector<16x1xf32> to vector<16x288xf32>
    %19 = vector.broadcast %17 : vector<1x288xf32> to vector<16x288xf32>
    %20 = arith.mulf %18, %19 : vector<16x288xf32>
    %21 = arith.addf %4, %20 : vector<16x288xf32>
    %22 = vector.extract_strided_slice %7 {offsets = [2], sizes = [288], strides = [1]} : vector<290xf32> to vector<288xf32>
    %23 = vector.extract_strided_slice %2 {offsets = [0, 2], sizes = [16, 1], strides = [1, 1]} : vector<16x36xf32> to vector<16x1xf32>
    %24 = vector.shape_cast %22 : vector<288xf32> to vector<1x288xf32>
    %25 = vector.broadcast %23 : vector<16x1xf32> to vector<16x288xf32>
    %26 = vector.broadcast %24 : vector<1x288xf32> to vector<16x288xf32>
    %27 = arith.mulf %25, %26 : vector<16x288xf32>
    %28 = arith.addf %5, %27 : vector<16x288xf32>
    %29 = vector.extract_strided_slice %1 {offsets = [0, 18], sizes = [1, 290], strides = [1, 1]} : vector<4x342xf32> to vector<1x290xf32>
    %30 = vector.shape_cast %29 : vector<1x290xf32> to vector<290xf32>
    %31 = vector.extract_strided_slice %30 {offsets = [0], sizes = [288], strides = [1]} : vector<290xf32> to vector<288xf32>
    %32 = vector.extract_strided_slice %2 {offsets = [0, 3], sizes = [16, 1], strides = [1, 1]} : vector<16x36xf32> to vector<16x1xf32>
    %33 = vector.shape_cast %31 : vector<288xf32> to vector<1x288xf32>
    %34 = vector.broadcast %32 : vector<16x1xf32> to vector<16x288xf32>
    %35 = vector.broadcast %33 : vector<1x288xf32> to vector<16x288xf32>
    %36 = arith.mulf %34, %35 : vector<16x288xf32>
    %37 = arith.addf %14, %36 : vector<16x288xf32>
    %38 = vector.extract_strided_slice %30 {offsets = [1], sizes = [288], strides = [1]} : vector<290xf32> to vector<288xf32>
    %39 = vector.extract_strided_slice %2 {offsets = [0, 4], sizes = [16, 1], strides = [1, 1]} : vector<16x36xf32> to vector<16x1xf32>
    %40 = vector.shape_cast %38 : vector<288xf32> to vector<1x288xf32>
    %41 = vector.broadcast %39 : vector<16x1xf32> to vector<16x288xf32>
    %42 = vector.broadcast %40 : vector<1x288xf32> to vector<16x288xf32>
    %43 = arith.mulf %41, %42 : vector<16x288xf32>
    %44 = arith.addf %21, %43 : vector<16x288xf32>
    %45 = vector.extract_strided_slice %30 {offsets = [2], sizes = [288], strides = [1]} : vector<290xf32> to vector<288xf32>
    %46 = vector.extract_strided_slice %2 {offsets = [0, 5], sizes = [16, 1], strides = [1, 1]} : vector<16x36xf32> to vector<16x1xf32>
    %47 = vector.shape_cast %45 : vector<288xf32> to vector<1x288xf32>
    %48 = vector.broadcast %46 : vector<16x1xf32> to vector<16x288xf32>
    %49 = vector.broadcast %47 : vector<1x288xf32> to vector<16x288xf32>
    %50 = arith.mulf %48, %49 : vector<16x288xf32>
    %51 = arith.addf %28, %50 : vector<16x288xf32>
    %52 = vector.extract_strided_slice %1 {offsets = [0, 36], sizes = [1, 290], strides = [1, 1]} : vector<4x342xf32> to vector<1x290xf32>
    %53 = vector.shape_cast %52 : vector<1x290xf32> to vector<290xf32>
    %54 = vector.extract_strided_slice %53 {offsets = [0], sizes = [288], strides = [1]} : vector<290xf32> to vector<288xf32>
    %55 = vector.extract_strided_slice %2 {offsets = [0, 6], sizes = [16, 1], strides = [1, 1]} : vector<16x36xf32> to vector<16x1xf32>
    %56 = vector.shape_cast %54 : vector<288xf32> to vector<1x288xf32>
    %57 = vector.broadcast %55 : vector<16x1xf32> to vector<16x288xf32>
    %58 = vector.broadcast %56 : vector<1x288xf32> to vector<16x288xf32>
    %59 = arith.mulf %57, %58 : vector<16x288xf32>
    %60 = arith.addf %37, %59 : vector<16x288xf32>
    %61 = vector.extract_strided_slice %53 {offsets = [1], sizes = [288], strides = [1]} : vector<290xf32> to vector<288xf32>
    %62 = vector.extract_strided_slice %2 {offsets = [0, 7], sizes = [16, 1], strides = [1, 1]} : vector<16x36xf32> to vector<16x1xf32>
    %63 = vector.shape_cast %61 : vector<288xf32> to vector<1x288xf32>
    %64 = vector.broadcast %62 : vector<16x1xf32> to vector<16x288xf32>
    %65 = vector.broadcast %63 : vector<1x288xf32> to vector<16x288xf32>
    %66 = arith.mulf %64, %65 : vector<16x288xf32>
    %67 = arith.addf %44, %66 : vector<16x288xf32>
    %68 = vector.extract_strided_slice %53 {offsets = [2], sizes = [288], strides = [1]} : vector<290xf32> to vector<288xf32>
    %69 = vector.extract_strided_slice %2 {offsets = [0, 8], sizes = [16, 1], strides = [1, 1]} : vector<16x36xf32> to vector<16x1xf32>
    %70 = vector.shape_cast %68 : vector<288xf32> to vector<1x288xf32>
    %71 = vector.broadcast %69 : vector<16x1xf32> to vector<16x288xf32>
    %72 = vector.broadcast %70 : vector<1x288xf32> to vector<16x288xf32>
    %73 = arith.mulf %71, %72 : vector<16x288xf32>
    %74 = arith.addf %51, %73 : vector<16x288xf32>
    %75 = vector.extract_strided_slice %1 {offsets = [1, 0], sizes = [1, 290], strides = [1, 1]} : vector<4x342xf32> to vector<1x290xf32>
    %76 = vector.shape_cast %75 : vector<1x290xf32> to vector<290xf32>
    %77 = vector.extract_strided_slice %76 {offsets = [0], sizes = [288], strides = [1]} : vector<290xf32> to vector<288xf32>
    %78 = vector.extract_strided_slice %2 {offsets = [0, 9], sizes = [16, 1], strides = [1, 1]} : vector<16x36xf32> to vector<16x1xf32>
    %79 = vector.shape_cast %77 : vector<288xf32> to vector<1x288xf32>
    %80 = vector.broadcast %78 : vector<16x1xf32> to vector<16x288xf32>
    %81 = vector.broadcast %79 : vector<1x288xf32> to vector<16x288xf32>
    %82 = arith.mulf %80, %81 : vector<16x288xf32>
    %83 = arith.addf %60, %82 : vector<16x288xf32>
    %84 = vector.extract_strided_slice %76 {offsets = [1], sizes = [288], strides = [1]} : vector<290xf32> to vector<288xf32>
    %85 = vector.extract_strided_slice %2 {offsets = [0, 10], sizes = [16, 1], strides = [1, 1]} : vector<16x36xf32> to vector<16x1xf32>
    %86 = vector.shape_cast %84 : vector<288xf32> to vector<1x288xf32>
    %87 = vector.broadcast %85 : vector<16x1xf32> to vector<16x288xf32>
    %88 = vector.broadcast %86 : vector<1x288xf32> to vector<16x288xf32>
    %89 = arith.mulf %87, %88 : vector<16x288xf32>
    %90 = arith.addf %67, %89 : vector<16x288xf32>
    %91 = vector.extract_strided_slice %76 {offsets = [2], sizes = [288], strides = [1]} : vector<290xf32> to vector<288xf32>
    %92 = vector.extract_strided_slice %2 {offsets = [0, 11], sizes = [16, 1], strides = [1, 1]} : vector<16x36xf32> to vector<16x1xf32>
    %93 = vector.shape_cast %91 : vector<288xf32> to vector<1x288xf32>
    %94 = vector.broadcast %92 : vector<16x1xf32> to vector<16x288xf32>
    %95 = vector.broadcast %93 : vector<1x288xf32> to vector<16x288xf32>
    %96 = arith.mulf %94, %95 : vector<16x288xf32>
    %97 = arith.addf %74, %96 : vector<16x288xf32>
    %98 = vector.extract_strided_slice %1 {offsets = [1, 18], sizes = [1, 290], strides = [1, 1]} : vector<4x342xf32> to vector<1x290xf32>
    %99 = vector.shape_cast %98 : vector<1x290xf32> to vector<290xf32>
    %100 = vector.extract_strided_slice %99 {offsets = [0], sizes = [288], strides = [1]} : vector<290xf32> to vector<288xf32>
    %101 = vector.extract_strided_slice %2 {offsets = [0, 12], sizes = [16, 1], strides = [1, 1]} : vector<16x36xf32> to vector<16x1xf32>
    %102 = vector.shape_cast %100 : vector<288xf32> to vector<1x288xf32>
    %103 = vector.broadcast %101 : vector<16x1xf32> to vector<16x288xf32>
    %104 = vector.broadcast %102 : vector<1x288xf32> to vector<16x288xf32>
    %105 = arith.mulf %103, %104 : vector<16x288xf32>
    %106 = arith.addf %83, %105 : vector<16x288xf32>
    %107 = vector.extract_strided_slice %99 {offsets = [1], sizes = [288], strides = [1]} : vector<290xf32> to vector<288xf32>
    %108 = vector.extract_strided_slice %2 {offsets = [0, 13], sizes = [16, 1], strides = [1, 1]} : vector<16x36xf32> to vector<16x1xf32>
    %109 = vector.shape_cast %107 : vector<288xf32> to vector<1x288xf32>
    %110 = vector.broadcast %108 : vector<16x1xf32> to vector<16x288xf32>
    %111 = vector.broadcast %109 : vector<1x288xf32> to vector<16x288xf32>
    %112 = arith.mulf %110, %111 : vector<16x288xf32>
    %113 = arith.addf %90, %112 : vector<16x288xf32>
    %114 = vector.extract_strided_slice %99 {offsets = [2], sizes = [288], strides = [1]} : vector<290xf32> to vector<288xf32>
    %115 = vector.extract_strided_slice %2 {offsets = [0, 14], sizes = [16, 1], strides = [1, 1]} : vector<16x36xf32> to vector<16x1xf32>
    %116 = vector.shape_cast %114 : vector<288xf32> to vector<1x288xf32>
    %117 = vector.broadcast %115 : vector<16x1xf32> to vector<16x288xf32>
    %118 = vector.broadcast %116 : vector<1x288xf32> to vector<16x288xf32>
    %119 = arith.mulf %117, %118 : vector<16x288xf32>
    %120 = arith.addf %97, %119 : vector<16x288xf32>
    %121 = vector.extract_strided_slice %1 {offsets = [1, 36], sizes = [1, 290], strides = [1, 1]} : vector<4x342xf32> to vector<1x290xf32>
    %122 = vector.shape_cast %121 : vector<1x290xf32> to vector<290xf32>
    %123 = vector.extract_strided_slice %122 {offsets = [0], sizes = [288], strides = [1]} : vector<290xf32> to vector<288xf32>
    %124 = vector.extract_strided_slice %2 {offsets = [0, 15], sizes = [16, 1], strides = [1, 1]} : vector<16x36xf32> to vector<16x1xf32>
    %125 = vector.shape_cast %123 : vector<288xf32> to vector<1x288xf32>
    %126 = vector.broadcast %124 : vector<16x1xf32> to vector<16x288xf32>
    %127 = vector.broadcast %125 : vector<1x288xf32> to vector<16x288xf32>
    %128 = arith.mulf %126, %127 : vector<16x288xf32>
    %129 = arith.addf %106, %128 : vector<16x288xf32>
    %130 = vector.extract_strided_slice %122 {offsets = [1], sizes = [288], strides = [1]} : vector<290xf32> to vector<288xf32>
    %131 = vector.extract_strided_slice %2 {offsets = [0, 16], sizes = [16, 1], strides = [1, 1]} : vector<16x36xf32> to vector<16x1xf32>
    %132 = vector.shape_cast %130 : vector<288xf32> to vector<1x288xf32>
    %133 = vector.broadcast %131 : vector<16x1xf32> to vector<16x288xf32>
    %134 = vector.broadcast %132 : vector<1x288xf32> to vector<16x288xf32>
    %135 = arith.mulf %133, %134 : vector<16x288xf32>
    %136 = arith.addf %113, %135 : vector<16x288xf32>
    %137 = vector.extract_strided_slice %122 {offsets = [2], sizes = [288], strides = [1]} : vector<290xf32> to vector<288xf32>
    %138 = vector.extract_strided_slice %2 {offsets = [0, 17], sizes = [16, 1], strides = [1, 1]} : vector<16x36xf32> to vector<16x1xf32>
    %139 = vector.shape_cast %137 : vector<288xf32> to vector<1x288xf32>
    %140 = vector.broadcast %138 : vector<16x1xf32> to vector<16x288xf32>
    %141 = vector.broadcast %139 : vector<1x288xf32> to vector<16x288xf32>
    %142 = arith.mulf %140, %141 : vector<16x288xf32>
    %143 = arith.addf %120, %142 : vector<16x288xf32>
    %144 = vector.extract_strided_slice %1 {offsets = [2, 0], sizes = [1, 290], strides = [1, 1]} : vector<4x342xf32> to vector<1x290xf32>
    %145 = vector.shape_cast %144 : vector<1x290xf32> to vector<290xf32>
    %146 = vector.extract_strided_slice %145 {offsets = [0], sizes = [288], strides = [1]} : vector<290xf32> to vector<288xf32>
    %147 = vector.extract_strided_slice %2 {offsets = [0, 18], sizes = [16, 1], strides = [1, 1]} : vector<16x36xf32> to vector<16x1xf32>
    %148 = vector.shape_cast %146 : vector<288xf32> to vector<1x288xf32>
    %149 = vector.broadcast %147 : vector<16x1xf32> to vector<16x288xf32>
    %150 = vector.broadcast %148 : vector<1x288xf32> to vector<16x288xf32>
    %151 = arith.mulf %149, %150 : vector<16x288xf32>
    %152 = arith.addf %129, %151 : vector<16x288xf32>
    %153 = vector.extract_strided_slice %145 {offsets = [1], sizes = [288], strides = [1]} : vector<290xf32> to vector<288xf32>
    %154 = vector.extract_strided_slice %2 {offsets = [0, 19], sizes = [16, 1], strides = [1, 1]} : vector<16x36xf32> to vector<16x1xf32>
    %155 = vector.shape_cast %153 : vector<288xf32> to vector<1x288xf32>
    %156 = vector.broadcast %154 : vector<16x1xf32> to vector<16x288xf32>
    %157 = vector.broadcast %155 : vector<1x288xf32> to vector<16x288xf32>
    %158 = arith.mulf %156, %157 : vector<16x288xf32>
    %159 = arith.addf %136, %158 : vector<16x288xf32>
    %160 = vector.extract_strided_slice %145 {offsets = [2], sizes = [288], strides = [1]} : vector<290xf32> to vector<288xf32>
    %161 = vector.extract_strided_slice %2 {offsets = [0, 20], sizes = [16, 1], strides = [1, 1]} : vector<16x36xf32> to vector<16x1xf32>
    %162 = vector.shape_cast %160 : vector<288xf32> to vector<1x288xf32>
    %163 = vector.broadcast %161 : vector<16x1xf32> to vector<16x288xf32>
    %164 = vector.broadcast %162 : vector<1x288xf32> to vector<16x288xf32>
    %165 = arith.mulf %163, %164 : vector<16x288xf32>
    %166 = arith.addf %143, %165 : vector<16x288xf32>
    %167 = vector.extract_strided_slice %1 {offsets = [2, 18], sizes = [1, 290], strides = [1, 1]} : vector<4x342xf32> to vector<1x290xf32>
    %168 = vector.shape_cast %167 : vector<1x290xf32> to vector<290xf32>
    %169 = vector.extract_strided_slice %168 {offsets = [0], sizes = [288], strides = [1]} : vector<290xf32> to vector<288xf32>
    %170 = vector.extract_strided_slice %2 {offsets = [0, 21], sizes = [16, 1], strides = [1, 1]} : vector<16x36xf32> to vector<16x1xf32>
    %171 = vector.shape_cast %169 : vector<288xf32> to vector<1x288xf32>
    %172 = vector.broadcast %170 : vector<16x1xf32> to vector<16x288xf32>
    %173 = vector.broadcast %171 : vector<1x288xf32> to vector<16x288xf32>
    %174 = arith.mulf %172, %173 : vector<16x288xf32>
    %175 = arith.addf %152, %174 : vector<16x288xf32>
    %176 = vector.extract_strided_slice %168 {offsets = [1], sizes = [288], strides = [1]} : vector<290xf32> to vector<288xf32>
    %177 = vector.extract_strided_slice %2 {offsets = [0, 22], sizes = [16, 1], strides = [1, 1]} : vector<16x36xf32> to vector<16x1xf32>
    %178 = vector.shape_cast %176 : vector<288xf32> to vector<1x288xf32>
    %179 = vector.broadcast %177 : vector<16x1xf32> to vector<16x288xf32>
    %180 = vector.broadcast %178 : vector<1x288xf32> to vector<16x288xf32>
    %181 = arith.mulf %179, %180 : vector<16x288xf32>
    %182 = arith.addf %159, %181 : vector<16x288xf32>
    %183 = vector.extract_strided_slice %168 {offsets = [2], sizes = [288], strides = [1]} : vector<290xf32> to vector<288xf32>
    %184 = vector.extract_strided_slice %2 {offsets = [0, 23], sizes = [16, 1], strides = [1, 1]} : vector<16x36xf32> to vector<16x1xf32>
    %185 = vector.shape_cast %183 : vector<288xf32> to vector<1x288xf32>
    %186 = vector.broadcast %184 : vector<16x1xf32> to vector<16x288xf32>
    %187 = vector.broadcast %185 : vector<1x288xf32> to vector<16x288xf32>
    %188 = arith.mulf %186, %187 : vector<16x288xf32>
    %189 = arith.addf %166, %188 : vector<16x288xf32>
    %190 = vector.extract_strided_slice %1 {offsets = [2, 36], sizes = [1, 290], strides = [1, 1]} : vector<4x342xf32> to vector<1x290xf32>
    %191 = vector.shape_cast %190 : vector<1x290xf32> to vector<290xf32>
    %192 = vector.extract_strided_slice %191 {offsets = [0], sizes = [288], strides = [1]} : vector<290xf32> to vector<288xf32>
    %193 = vector.extract_strided_slice %2 {offsets = [0, 24], sizes = [16, 1], strides = [1, 1]} : vector<16x36xf32> to vector<16x1xf32>
    %194 = vector.shape_cast %192 : vector<288xf32> to vector<1x288xf32>
    %195 = vector.broadcast %193 : vector<16x1xf32> to vector<16x288xf32>
    %196 = vector.broadcast %194 : vector<1x288xf32> to vector<16x288xf32>
    %197 = arith.mulf %195, %196 : vector<16x288xf32>
    %198 = arith.addf %175, %197 : vector<16x288xf32>
    %199 = vector.extract_strided_slice %191 {offsets = [1], sizes = [288], strides = [1]} : vector<290xf32> to vector<288xf32>
    %200 = vector.extract_strided_slice %2 {offsets = [0, 25], sizes = [16, 1], strides = [1, 1]} : vector<16x36xf32> to vector<16x1xf32>
    %201 = vector.shape_cast %199 : vector<288xf32> to vector<1x288xf32>
    %202 = vector.broadcast %200 : vector<16x1xf32> to vector<16x288xf32>
    %203 = vector.broadcast %201 : vector<1x288xf32> to vector<16x288xf32>
    %204 = arith.mulf %202, %203 : vector<16x288xf32>
    %205 = arith.addf %182, %204 : vector<16x288xf32>
    %206 = vector.extract_strided_slice %191 {offsets = [2], sizes = [288], strides = [1]} : vector<290xf32> to vector<288xf32>
    %207 = vector.extract_strided_slice %2 {offsets = [0, 26], sizes = [16, 1], strides = [1, 1]} : vector<16x36xf32> to vector<16x1xf32>
    %208 = vector.shape_cast %206 : vector<288xf32> to vector<1x288xf32>
    %209 = vector.broadcast %207 : vector<16x1xf32> to vector<16x288xf32>
    %210 = vector.broadcast %208 : vector<1x288xf32> to vector<16x288xf32>
    %211 = arith.mulf %209, %210 : vector<16x288xf32>
    %212 = arith.addf %189, %211 : vector<16x288xf32>
    %213 = vector.extract_strided_slice %1 {offsets = [3, 0], sizes = [1, 290], strides = [1, 1]} : vector<4x342xf32> to vector<1x290xf32>
    %214 = vector.shape_cast %213 : vector<1x290xf32> to vector<290xf32>
    %215 = vector.extract_strided_slice %214 {offsets = [0], sizes = [288], strides = [1]} : vector<290xf32> to vector<288xf32>
    %216 = vector.extract_strided_slice %2 {offsets = [0, 27], sizes = [16, 1], strides = [1, 1]} : vector<16x36xf32> to vector<16x1xf32>
    %217 = vector.shape_cast %215 : vector<288xf32> to vector<1x288xf32>
    %218 = vector.broadcast %216 : vector<16x1xf32> to vector<16x288xf32>
    %219 = vector.broadcast %217 : vector<1x288xf32> to vector<16x288xf32>
    %220 = arith.mulf %218, %219 : vector<16x288xf32>
    %221 = arith.addf %198, %220 : vector<16x288xf32>
    %222 = vector.extract_strided_slice %214 {offsets = [1], sizes = [288], strides = [1]} : vector<290xf32> to vector<288xf32>
    %223 = vector.extract_strided_slice %2 {offsets = [0, 28], sizes = [16, 1], strides = [1, 1]} : vector<16x36xf32> to vector<16x1xf32>
    %224 = vector.shape_cast %222 : vector<288xf32> to vector<1x288xf32>
    %225 = vector.broadcast %223 : vector<16x1xf32> to vector<16x288xf32>
    %226 = vector.broadcast %224 : vector<1x288xf32> to vector<16x288xf32>
    %227 = arith.mulf %225, %226 : vector<16x288xf32>
    %228 = arith.addf %205, %227 : vector<16x288xf32>
    %229 = vector.extract_strided_slice %214 {offsets = [2], sizes = [288], strides = [1]} : vector<290xf32> to vector<288xf32>
    %230 = vector.extract_strided_slice %2 {offsets = [0, 29], sizes = [16, 1], strides = [1, 1]} : vector<16x36xf32> to vector<16x1xf32>
    %231 = vector.shape_cast %229 : vector<288xf32> to vector<1x288xf32>
    %232 = vector.broadcast %230 : vector<16x1xf32> to vector<16x288xf32>
    %233 = vector.broadcast %231 : vector<1x288xf32> to vector<16x288xf32>
    %234 = arith.mulf %232, %233 : vector<16x288xf32>
    %235 = arith.addf %212, %234 : vector<16x288xf32>
    %236 = vector.extract_strided_slice %1 {offsets = [3, 18], sizes = [1, 290], strides = [1, 1]} : vector<4x342xf32> to vector<1x290xf32>
    %237 = vector.shape_cast %236 : vector<1x290xf32> to vector<290xf32>
    %238 = vector.extract_strided_slice %237 {offsets = [0], sizes = [288], strides = [1]} : vector<290xf32> to vector<288xf32>
    %239 = vector.extract_strided_slice %2 {offsets = [0, 30], sizes = [16, 1], strides = [1, 1]} : vector<16x36xf32> to vector<16x1xf32>
    %240 = vector.shape_cast %238 : vector<288xf32> to vector<1x288xf32>
    %241 = vector.broadcast %239 : vector<16x1xf32> to vector<16x288xf32>
    %242 = vector.broadcast %240 : vector<1x288xf32> to vector<16x288xf32>
    %243 = arith.mulf %241, %242 : vector<16x288xf32>
    %244 = arith.addf %221, %243 : vector<16x288xf32>
    %245 = vector.extract_strided_slice %237 {offsets = [1], sizes = [288], strides = [1]} : vector<290xf32> to vector<288xf32>
    %246 = vector.extract_strided_slice %2 {offsets = [0, 31], sizes = [16, 1], strides = [1, 1]} : vector<16x36xf32> to vector<16x1xf32>
    %247 = vector.shape_cast %245 : vector<288xf32> to vector<1x288xf32>
    %248 = vector.broadcast %246 : vector<16x1xf32> to vector<16x288xf32>
    %249 = vector.broadcast %247 : vector<1x288xf32> to vector<16x288xf32>
    %250 = arith.mulf %248, %249 : vector<16x288xf32>
    %251 = arith.addf %228, %250 : vector<16x288xf32>
    %252 = vector.extract_strided_slice %237 {offsets = [2], sizes = [288], strides = [1]} : vector<290xf32> to vector<288xf32>
    %253 = vector.extract_strided_slice %2 {offsets = [0, 32], sizes = [16, 1], strides = [1, 1]} : vector<16x36xf32> to vector<16x1xf32>
    %254 = vector.shape_cast %252 : vector<288xf32> to vector<1x288xf32>
    %255 = vector.broadcast %253 : vector<16x1xf32> to vector<16x288xf32>
    %256 = vector.broadcast %254 : vector<1x288xf32> to vector<16x288xf32>
    %257 = arith.mulf %255, %256 : vector<16x288xf32>
    %258 = arith.addf %235, %257 : vector<16x288xf32>
    %259 = vector.extract_strided_slice %1 {offsets = [3, 36], sizes = [1, 290], strides = [1, 1]} : vector<4x342xf32> to vector<1x290xf32>
    %260 = vector.shape_cast %259 : vector<1x290xf32> to vector<290xf32>
    %261 = vector.extract_strided_slice %260 {offsets = [0], sizes = [288], strides = [1]} : vector<290xf32> to vector<288xf32>
    %262 = vector.extract_strided_slice %2 {offsets = [0, 33], sizes = [16, 1], strides = [1, 1]} : vector<16x36xf32> to vector<16x1xf32>
    %263 = vector.shape_cast %261 : vector<288xf32> to vector<1x288xf32>
    %264 = vector.broadcast %262 : vector<16x1xf32> to vector<16x288xf32>
    %265 = vector.broadcast %263 : vector<1x288xf32> to vector<16x288xf32>
    %266 = arith.mulf %264, %265 : vector<16x288xf32>
    %267 = arith.addf %244, %266 : vector<16x288xf32>
    %268 = vector.extract_strided_slice %260 {offsets = [1], sizes = [288], strides = [1]} : vector<290xf32> to vector<288xf32>
    %269 = vector.extract_strided_slice %2 {offsets = [0, 34], sizes = [16, 1], strides = [1, 1]} : vector<16x36xf32> to vector<16x1xf32>
    %270 = vector.shape_cast %268 : vector<288xf32> to vector<1x288xf32>
    %271 = vector.broadcast %269 : vector<16x1xf32> to vector<16x288xf32>
    %272 = vector.broadcast %270 : vector<1x288xf32> to vector<16x288xf32>
    %273 = arith.mulf %271, %272 : vector<16x288xf32>
    %274 = arith.addf %251, %273 : vector<16x288xf32>
    %275 = vector.extract_strided_slice %260 {offsets = [2], sizes = [288], strides = [1]} : vector<290xf32> to vector<288xf32>
    %276 = vector.extract_strided_slice %2 {offsets = [0, 35], sizes = [16, 1], strides = [1, 1]} : vector<16x36xf32> to vector<16x1xf32>
    %277 = vector.shape_cast %275 : vector<288xf32> to vector<1x288xf32>
    %278 = vector.broadcast %276 : vector<16x1xf32> to vector<16x288xf32>
    %279 = vector.broadcast %277 : vector<1x288xf32> to vector<16x288xf32>
    %280 = arith.mulf %278, %279 : vector<16x288xf32>
    %281 = arith.addf %258, %280 : vector<16x288xf32>
    %282 = arith.addf %267, %274 : vector<16x288xf32>
    %283 = arith.addf %282, %281 : vector<16x288xf32>
    %284 = vector.extract_strided_slice %283 {offsets = [0, 0], sizes = [16, 16], strides = [1, 1]} : vector<16x288xf32> to vector<16x16xf32>
    %c0_6 = arith.constant 0 : index
    %c0_7 = arith.constant 0 : index
    %c0_8 = arith.constant 0 : index
    %285 = vector.load %arg3[%c0_6, %c0_7, %c0_8] : memref<1x16x256xf32, #tpu.memory_space<vmem>>, vector<1x16x16xf32>
    %286 = vector.shape_cast %285 : vector<1x16x16xf32> to vector<16x16xf32>
    %287 = vector.shape_cast %284 : vector<16x16xf32> to vector<1x16x16xf32>
    tpu.vector_store %arg3[%c0_6, %c0_7, %c0_8], %287 {strides = array<i32>} : memref<1x16x256xf32, #tpu.memory_space<vmem>>, vector<1x16x16xf32>,
    %288 = vector.extract_strided_slice %283 {offsets = [0, 18], sizes = [16, 16], strides = [1, 1]} : vector<16x288xf32> to vector<16x16xf32>
    %c0_9 = arith.constant 0 : index
    %c0_10 = arith.constant 0 : index
    %c16 = arith.constant 16 : index
    %289 = vector.load %arg3[%c0_9, %c0_10, %c16] : memref<1x16x256xf32, #tpu.memory_space<vmem>>, vector<1x16x16xf32>
    %290 = vector.shape_cast %289 : vector<1x16x16xf32> to vector<16x16xf32>
    %291 = vector.shape_cast %288 : vector<16x16xf32> to vector<1x16x16xf32>
    tpu.vector_store %arg3[%c0_9, %c0_10, %c16], %291 {strides = array<i32>} : memref<1x16x256xf32, #tpu.memory_space<vmem>>, vector<1x16x16xf32>,
    %292 = vector.extract_strided_slice %283 {offsets = [0, 36], sizes = [16, 16], strides = [1, 1]} : vector<16x288xf32> to vector<16x16xf32>
    %c0_11 = arith.constant 0 : index
    %c0_12 = arith.constant 0 : index
    %c32 = arith.constant 32 : index
    %293 = vector.load %arg3[%c0_11, %c0_12, %c32] : memref<1x16x256xf32, #tpu.memory_space<vmem>>, vector<1x16x16xf32>
    %294 = vector.shape_cast %293 : vector<1x16x16xf32> to vector<16x16xf32>
    %295 = vector.shape_cast %292 : vector<16x16xf32> to vector<1x16x16xf32>
    tpu.vector_store %arg3[%c0_11, %c0_12, %c32], %295 {strides = array<i32>} : memref<1x16x256xf32, #tpu.memory_space<vmem>>, vector<1x16x16xf32>,
    %296 = vector.extract_strided_slice %283 {offsets = [0, 54], sizes = [16, 16], strides = [1, 1]} : vector<16x288xf32> to vector<16x16xf32>
    %c0_13 = arith.constant 0 : index
    %c0_14 = arith.constant 0 : index
    %c48 = arith.constant 48 : index
    %297 = vector.load %arg3[%c0_13, %c0_14, %c48] : memref<1x16x256xf32, #tpu.memory_space<vmem>>, vector<1x16x16xf32>
    %298 = vector.shape_cast %297 : vector<1x16x16xf32> to vector<16x16xf32>
    %299 = vector.shape_cast %296 : vector<16x16xf32> to vector<1x16x16xf32>
    tpu.vector_store %arg3[%c0_13, %c0_14, %c48], %299 {strides = array<i32>} : memref<1x16x256xf32, #tpu.memory_space<vmem>>, vector<1x16x16xf32>,
    %300 = vector.extract_strided_slice %283 {offsets = [0, 72], sizes = [16, 16], strides = [1, 1]} : vector<16x288xf32> to vector<16x16xf32>
    %c0_15 = arith.constant 0 : index
    %c0_16 = arith.constant 0 : index
    %c64 = arith.constant 64 : index
    %301 = vector.load %arg3[%c0_15, %c0_16, %c64] : memref<1x16x256xf32, #tpu.memory_space<vmem>>, vector<1x16x16xf32>
    %302 = vector.shape_cast %301 : vector<1x16x16xf32> to vector<16x16xf32>
    %303 = vector.shape_cast %300 : vector<16x16xf32> to vector<1x16x16xf32>
    tpu.vector_store %arg3[%c0_15, %c0_16, %c64], %303 {strides = array<i32>} : memref<1x16x256xf32, #tpu.memory_space<vmem>>, vector<1x16x16xf32>,
    %304 = vector.extract_strided_slice %283 {offsets = [0, 90], sizes = [16, 16], strides = [1, 1]} : vector<16x288xf32> to vector<16x16xf32>
    %c0_17 = arith.constant 0 : index
    %c0_18 = arith.constant 0 : index
    %c80 = arith.constant 80 : index
    %305 = vector.load %arg3[%c0_17, %c0_18, %c80] : memref<1x16x256xf32, #tpu.memory_space<vmem>>, vector<1x16x16xf32>
    %306 = vector.shape_cast %305 : vector<1x16x16xf32> to vector<16x16xf32>
    %307 = vector.shape_cast %304 : vector<16x16xf32> to vector<1x16x16xf32>
    tpu.vector_store %arg3[%c0_17, %c0_18, %c80], %307 {strides = array<i32>} : memref<1x16x256xf32, #tpu.memory_space<vmem>>, vector<1x16x16xf32>,
    %308 = vector.extract_strided_slice %283 {offsets = [0, 108], sizes = [16, 16], strides = [1, 1]} : vector<16x288xf32> to vector<16x16xf32>
    %c0_19 = arith.constant 0 : index
    %c0_20 = arith.constant 0 : index
    %c96 = arith.constant 96 : index
    %309 = vector.load %arg3[%c0_19, %c0_20, %c96] : memref<1x16x256xf32, #tpu.memory_space<vmem>>, vector<1x16x16xf32>
    %310 = vector.shape_cast %309 : vector<1x16x16xf32> to vector<16x16xf32>
    %311 = vector.shape_cast %308 : vector<16x16xf32> to vector<1x16x16xf32>
    tpu.vector_store %arg3[%c0_19, %c0_20, %c96], %311 {strides = array<i32>} : memref<1x16x256xf32, #tpu.memory_space<vmem>>, vector<1x16x16xf32>,
    %312 = vector.extract_strided_slice %283 {offsets = [0, 126], sizes = [16, 16], strides = [1, 1]} : vector<16x288xf32> to vector<16x16xf32>
    %c0_21 = arith.constant 0 : index
    %c0_22 = arith.constant 0 : index
    %c112 = arith.constant 112 : index
    %313 = vector.load %arg3[%c0_21, %c0_22, %c112] : memref<1x16x256xf32, #tpu.memory_space<vmem>>, vector<1x16x16xf32>
    %314 = vector.shape_cast %313 : vector<1x16x16xf32> to vector<16x16xf32>
    %315 = vector.shape_cast %312 : vector<16x16xf32> to vector<1x16x16xf32>
    tpu.vector_store %arg3[%c0_21, %c0_22, %c112], %315 {strides = array<i32>} : memref<1x16x256xf32, #tpu.memory_space<vmem>>, vector<1x16x16xf32>,
    %316 = vector.extract_strided_slice %283 {offsets = [0, 144], sizes = [16, 16], strides = [1, 1]} : vector<16x288xf32> to vector<16x16xf32>
    %c0_23 = arith.constant 0 : index
    %c0_24 = arith.constant 0 : index
    %c128 = arith.constant 128 : index
    %317 = vector.load %arg3[%c0_23, %c0_24, %c128] : memref<1x16x256xf32, #tpu.memory_space<vmem>>, vector<1x16x16xf32>
    %318 = vector.shape_cast %317 : vector<1x16x16xf32> to vector<16x16xf32>
    %319 = vector.shape_cast %316 : vector<16x16xf32> to vector<1x16x16xf32>
    tpu.vector_store %arg3[%c0_23, %c0_24, %c128], %319 {strides = array<i32>} : memref<1x16x256xf32, #tpu.memory_space<vmem>>, vector<1x16x16xf32>,
    %320 = vector.extract_strided_slice %283 {offsets = [0, 162], sizes = [16, 16], strides = [1, 1]} : vector<16x288xf32> to vector<16x16xf32>
    %c0_25 = arith.constant 0 : index
    %c0_26 = arith.constant 0 : index
    %c144 = arith.constant 144 : index
    %321 = vector.load %arg3[%c0_25, %c0_26, %c144] : memref<1x16x256xf32, #tpu.memory_space<vmem>>, vector<1x16x16xf32>
    %322 = vector.shape_cast %321 : vector<1x16x16xf32> to vector<16x16xf32>
    %323 = vector.shape_cast %320 : vector<16x16xf32> to vector<1x16x16xf32>
    tpu.vector_store %arg3[%c0_25, %c0_26, %c144], %323 {strides = array<i32>} : memref<1x16x256xf32, #tpu.memory_space<vmem>>, vector<1x16x16xf32>,
    %324 = vector.extract_strided_slice %283 {offsets = [0, 180], sizes = [16, 16], strides = [1, 1]} : vector<16x288xf32> to vector<16x16xf32>
    %c0_27 = arith.constant 0 : index
    %c0_28 = arith.constant 0 : index
    %c160 = arith.constant 160 : index
    %325 = vector.load %arg3[%c0_27, %c0_28, %c160] : memref<1x16x256xf32, #tpu.memory_space<vmem>>, vector<1x16x16xf32>
    %326 = vector.shape_cast %325 : vector<1x16x16xf32> to vector<16x16xf32>
    %327 = vector.shape_cast %324 : vector<16x16xf32> to vector<1x16x16xf32>
    tpu.vector_store %arg3[%c0_27, %c0_28, %c160], %327 {strides = array<i32>} : memref<1x16x256xf32, #tpu.memory_space<vmem>>, vector<1x16x16xf32>,
    %328 = vector.extract_strided_slice %283 {offsets = [0, 198], sizes = [16, 16], strides = [1, 1]} : vector<16x288xf32> to vector<16x16xf32>
    %c0_29 = arith.constant 0 : index
    %c0_30 = arith.constant 0 : index
    %c176 = arith.constant 176 : index
    %329 = vector.load %arg3[%c0_29, %c0_30, %c176] : memref<1x16x256xf32, #tpu.memory_space<vmem>>, vector<1x16x16xf32>
    %330 = vector.shape_cast %329 : vector<1x16x16xf32> to vector<16x16xf32>
    %331 = vector.shape_cast %328 : vector<16x16xf32> to vector<1x16x16xf32>
    tpu.vector_store %arg3[%c0_29, %c0_30, %c176], %331 {strides = array<i32>} : memref<1x16x256xf32, #tpu.memory_space<vmem>>, vector<1x16x16xf32>,
    %332 = vector.extract_strided_slice %283 {offsets = [0, 216], sizes = [16, 16], strides = [1, 1]} : vector<16x288xf32> to vector<16x16xf32>
    %c0_31 = arith.constant 0 : index
    %c0_32 = arith.constant 0 : index
    %c192 = arith.constant 192 : index
    %333 = vector.load %arg3[%c0_31, %c0_32, %c192] : memref<1x16x256xf32, #tpu.memory_space<vmem>>, vector<1x16x16xf32>
    %334 = vector.shape_cast %333 : vector<1x16x16xf32> to vector<16x16xf32>
    %335 = vector.shape_cast %332 : vector<16x16xf32> to vector<1x16x16xf32>
    tpu.vector_store %arg3[%c0_31, %c0_32, %c192], %335 {strides = array<i32>} : memref<1x16x256xf32, #tpu.memory_space<vmem>>, vector<1x16x16xf32>,
    %336 = vector.extract_strided_slice %283 {offsets = [0, 234], sizes = [16, 16], strides = [1, 1]} : vector<16x288xf32> to vector<16x16xf32>
    %c0_33 = arith.constant 0 : index
    %c0_34 = arith.constant 0 : index
    %c208 = arith.constant 208 : index
    %337 = vector.load %arg3[%c0_33, %c0_34, %c208] : memref<1x16x256xf32, #tpu.memory_space<vmem>>, vector<1x16x16xf32>
    %338 = vector.shape_cast %337 : vector<1x16x16xf32> to vector<16x16xf32>
    %339 = vector.shape_cast %336 : vector<16x16xf32> to vector<1x16x16xf32>
    tpu.vector_store %arg3[%c0_33, %c0_34, %c208], %339 {strides = array<i32>} : memref<1x16x256xf32, #tpu.memory_space<vmem>>, vector<1x16x16xf32>,
    %340 = vector.extract_strided_slice %283 {offsets = [0, 252], sizes = [16, 16], strides = [1, 1]} : vector<16x288xf32> to vector<16x16xf32>
    %c0_35 = arith.constant 0 : index
    %c0_36 = arith.constant 0 : index
    %c224 = arith.constant 224 : index
    %341 = vector.load %arg3[%c0_35, %c0_36, %c224] : memref<1x16x256xf32, #tpu.memory_space<vmem>>, vector<1x16x16xf32>
    %342 = vector.shape_cast %341 : vector<1x16x16xf32> to vector<16x16xf32>
    %343 = vector.shape_cast %340 : vector<16x16xf32> to vector<1x16x16xf32>
    tpu.vector_store %arg3[%c0_35, %c0_36, %c224], %343 {strides = array<i32>} : memref<1x16x256xf32, #tpu.memory_space<vmem>>, vector<1x16x16xf32>,
    %344 = vector.extract_strided_slice %283 {offsets = [0, 270], sizes = [16, 16], strides = [1, 1]} : vector<16x288xf32> to vector<16x16xf32>
    %c0_37 = arith.constant 0 : index
    %c0_38 = arith.constant 0 : index
    %c240 = arith.constant 240 : index
    %345 = vector.load %arg3[%c0_37, %c0_38, %c240] : memref<1x16x256xf32, #tpu.memory_space<vmem>>, vector<1x16x16xf32>
    %346 = vector.shape_cast %345 : vector<1x16x16xf32> to vector<16x16xf32>
    %347 = vector.shape_cast %344 : vector<16x16xf32> to vector<1x16x16xf32>
    tpu.vector_store %arg3[%c0_37, %c0_38, %c240], %347 {strides = array<i32>} : memref<1x16x256xf32, #tpu.memory_space<vmem>>, vector<1x16x16xf32>,
    return
  }
  func.func @transform_0(%arg0: i32) -> (i32, i32, i32) {
    %c0_i32 = arith.constant 0 : i32
    %c0_i32_0 = arith.constant 0 : i32
    %c0_i32_1 = arith.constant 0 : i32
    return %arg0, %c0_i32, %c0_i32_0 : i32, i32, i32
  }
  func.func @transform_1(%arg0: i32) -> (i32, i32) {
    %c0_i32 = arith.constant 0 : i32
    %c0_i32_0 = arith.constant 0 : i32
    %c0_i32_1 = arith.constant 0 : i32
    return %c0_i32, %c0_i32_0 : i32, i32
  }
  func.func @transform_2(%arg0: i32) -> (i32, i32, i32) {
    %c0_i32 = arith.constant 0 : i32
    %c0_i32_0 = arith.constant 0 : i32
    %c0_i32_1 = arith.constant 0 : i32
    return %arg0, %c0_i32, %c0_i32_0 : i32, i32, i32
  }
}

</mosaic_0001>

<llo_original>
// kernel: rrl_conv.1
$region0: #{rrl_conv.1}
  #allocation0 [shape = 'u32[]', space=smem, size = 0x4, offset = 0x4, fixed_abs, tag = 'smem constant byte address 0x4 - core index']
  #allocation1 [shape = 'u32[72,128]{1,0:T(1,128)}', space=vmem, size = 0x9000, scoped, tag = 'internal scratch']
  %s0 = inlined_call_operand.vmem [shape: f32[2,4,342], index: 0, kind: input, shape index: {}]
  %s1 = inlined_call_operand.vmem [shape: f32[16,36], index: 1, kind: input, shape index: {}]
  %s2 = inlined_call_operand.vmem [shape: f32[2,16,256], index: 2, kind: output, shape index: {}]
  %s3 = sld [smem:[#allocation0]]
  $region41: #{rrl_conv.1} parent=0
    _
  %s5 = ssub.s32 1, %s3
  %s6 = scalar_select 0, %s5, %s3
  loop: start=0, step=1, limit=4
  $region2: #{rrl_conv.1} parent=0 // loop_pre_header
    _
  $region3: #{rrl_conv.1} parent=0 // loop_header
    %s8 = sphi 0, %s12
    %p9 = scmp.ge.s32.totalorder %s8, 4
    %s18 = sphi 0, %s20
    %s21 = sphi 0, %s18
    %s22 = sphi 0, %s21
    %s38 = sphi 0, %s22
    %s42 = sphi 0, %s42
    %s44 = sphi 0, %s42
    %s45 = sphi 0, %s44
    %s59 = sphi 0, %s45
    %s65 = sphi 0, %s67
    %s68 = sphi 0, %s65
    %s69 = sphi 0, %s68
    %s85 = sphi 0, %s69
  $region4: #{rrl_conv.1} parent=0 // loop_header_branch
    %11 = sbr.rel (%p9) target = $region8
  $region5: #{rrl_conv.1} parent=0 // loop_body
    %s13 = ssub.s32 %s8, 1
    %s14 = ssub.s32 %s8, 2
    %s15 = sadd.s32 %s8, 1
    %s16 = ssub.s32 %s8, %s15
    %p17 = scmp.eq.s32.totalorder %s16, 0
    %s19 = sadd.s32 %s18, 1
    %s20 = scalar_select %p17, %s18, %s19
    %p23 = pneg %p17
    %p24 = scmp.eq.s32.totalorder %s8, 1
    %p25 = por %p23, %p24
    %p26 = scmp.ne.s32.totalorder %s18, %s21
    %p27 = scmp.eq.s32.totalorder %s8, 0
    %p28 = por %p26, %p27
    %p29 = scmp.ne.s32.totalorder %s18, %s21
    %p30 = scmp.eq.s32.totalorder %s13, 1
    %p31 = por %p29, %p30
    %p32 = scmp.ne.s32.totalorder %s21, %s22
    %p33 = scmp.eq.s32.totalorder %s13, 0
    %p34 = por %p32, %p33
    %p35 = scmp.ne.s32.totalorder %s21, %s22
    %p36 = scmp.eq.s32.totalorder %s14, 1
    %p37 = por %p35, %p36
    %p39 = scmp.ne.s32.totalorder %s22, %s38
    %p40 = scmp.eq.s32.totalorder %s14, 0
    %p41 = por %p39, %p40
    %s43 = sadd.s32 %s42, 1
    %p46 = scmp.eq.s32.totalorder %s8, 1
    %p47 = scmp.ne.s32.totalorder %s42, %s44
    %p48 = scmp.eq.s32.totalorder %s8, 0
    %p49 = por %p47, %p48
    %p50 = scmp.ne.s32.totalorder %s42, %s44
    %p51 = scmp.eq.s32.totalorder %s13, 1
    %p52 = por %p50, %p51
    %p53 = scmp.ne.s32.totalorder %s44, %s45
    %p54 = scmp.eq.s32.totalorder %s13, 0
    %p55 = por %p53, %p54
    %p56 = scmp.ne.s32.totalorder %s44, %s45
    %p57 = scmp.eq.s32.totalorder %s14, 1
    %p58 = por %p56, %p57
    %p60 = scmp.ne.s32.totalorder %s45, %s59
    %p61 = scmp.eq.s32.totalorder %s14, 0
    %p62 = por %p60, %p61
    %s63 = ssub.s32 %s8, %s15
    %p64 = scmp.eq.s32.totalorder %s63, 0
    %s66 = sadd.s32 %s65, 1
    %s67 = scalar_select %p64, %s65, %s66
    %p70 = pneg %p64
    %p71 = scmp.eq.s32.totalorder %s8, 1
    %p72 = por %p70, %p71
    %p73 = scmp.ne.s32.totalorder %s65, %s68
    %p74 = scmp.eq.s32.totalorder %s8, 0
    %p75 = por %p73, %p74
    %p76 = scmp.ne.s32.totalorder %s65, %s68
    %p77 = scmp.eq.s32.totalorder %s13, 1
    %p78 = por %p76, %p77
    %p79 = scmp.ne.s32.totalorder %s68, %s69
    %p80 = scmp.eq.s32.totalorder %s13, 0
    %p81 = por %p79, %p80
    %p82 = scmp.ne.s32.totalorder %s68, %s69
    %p83 = scmp.eq.s32.totalorder %s14, 1
    %p84 = por %p82, %p83
    %p86 = scmp.ne.s32.totalorder %s69, %s85
    %p87 = scmp.eq.s32.totalorder %s14, 0
    %p88 = por %p86, %p87
    %p89 = scmp.le.s32.totalorder 1, %s8
    %p90 = scmp.lt.s32.totalorder %s8, 3
    %p91 = pnand %p89, %p90
    %p92 = pneg %p91
    // Predicated region
    $region9: #{rrl_conv.1} parent=5 // pred_check
      _
    $region10: #{rrl_conv.1} parent=5 // pred_check_branch
      %94 = sbr.rel (%p91) target = $region12
    $region11: #{rrl_conv.1} parent=5 // pred_region
      %s95 = ssub.s32 %s8, 1
      // Predicated region
      $region13: #{rrl_conv.1} parent=11 // pred_check
        %p96 = pneg %p55
      $region14: #{rrl_conv.1} parent=11 // pred_check_branch
        %98 = sbr.rel (%p96) target = $region16
      $region15: #{rrl_conv.1} parent=11 // pred_region
        _
      $region16: #{rrl_conv.1} parent=11 // pred_fallthru
        _
    $region12: #{rrl_conv.1} parent=5 // pred_fallthru
      _
    %p99 = scmp.lt.s32.totalorder %s8, 2
    // Predicated region
    $region17: #{rrl_conv.1} parent=5 // pred_check
      %p100 = pneg %p99
    $region18: #{rrl_conv.1} parent=5 // pred_check_branch
      %102 = sbr.rel (%p100) target = $region20
    $region19: #{rrl_conv.1} parent=5 // pred_region
      // Predicated region
      $region21: #{rrl_conv.1} parent=19 // pred_check
        %p103 = pneg %p28
      $region22: #{rrl_conv.1} parent=19 // pred_check_branch
        %105 = sbr.rel (%p103) target = $region24
      $region23: #{rrl_conv.1} parent=19 // pred_region
        %p106 = scmp.lt.s32.totalorder %s8, 1
        %s107 = scalar_select %p106, %s8, 1
        %s108 = smul.addr %s107, 3
        %s109 = smul.addr %s108, 4
        %s110 = scalar_lea.vmem %s0, %s109
      $region24: #{rrl_conv.1} parent=19 // pred_fallthru
        _
    $region20: #{rrl_conv.1} parent=5 // pred_fallthru
      _
    %p111 = scmp.le.s32.totalorder 1, %s8
    %p112 = scmp.lt.s32.totalorder %s8, 3
    %p113 = pnand %p111, %p112
    %p114 = pneg %p113
    // Predicated region
    $region25: #{rrl_conv.1} parent=5 // pred_check
      _
    $region26: #{rrl_conv.1} parent=5 // pred_check_branch
      %116 = sbr.rel (%p113) target = $region28
    $region27: #{rrl_conv.1} parent=5 // pred_region
      %s117 = ssub.s32 %s8, 1
      %p118 = scmp.lt.s32.totalorder %s13, 1
      %s119 = scalar_select %p118, %s13, 1
      %s120 = smul.addr %s119, 3
      %s121 = smul.addr %s120, 4
      %s122 = scalar_lea.vmem %s0, %s121
      %p123 = pneg %p34
      %p124 = pneg %p31
      %p125 = pneg %p55
      %p126 = pneg %p52
      %p127 = pneg %p81
      %p128 = pneg %p78
      %p129 = scmp.lt.s32.totalorder %s13, 1
      %s130 = scalar_select %p129, %s13, 1
      %s131 = smul.addr %s130, 4
      %s132 = smul.addr %s131, 8
      %s133 = scalar_lea.vmem %s2, %s132
      %p134 = scmp.lt.s32.totalorder %s13, 1
      %s135 = scalar_select %p134, %s13, 1
      %s136 = smul.addr %s135, 3
      %s137 = smul.addr %s136, 4
      %s138 = scalar_lea.vmem %s0, %s137
      %p139 = scmp.lt.s32.totalorder %s13, 1
      %s140 = scalar_select %p139, %s13, 1
      %s141 = smul.addr %s140, 4
      %s142 = smul.addr %s141, 8
      %s143 = scalar_lea.vmem %s2, %s142
      %v144 = vld [vmem:[%s138] sm:$0xff]
      %v145 = vld [vmem:[%s138 + $0x8] sm:$0xf]
      %v146 = vld [vmem:[%s1] sm:$0xff]
      %v147 = vld [vmem:[%s1 + $0x8] sm:$0xff]
      %149 = vset.pattern.permute.xlu0 0
      %150 = vperm.xlu0 %149, %v146
      %v151 = vpop.permute.xlu0 %150
      %154 = vset.pattern.permute.xlu0 0
      %155 = vperm.xlu0 %154, %v147
      %v156 = vpop.permute.xlu0 %155
      %v160 = vperm.slane %v144, 0
      %v161 = vperm.slane %v144, 4
      %v162 = vperm.slane %v145, 0
      %v166 = vperm.slane %v160, 0
      %v167 = vperm.slane %v161, 0
      %v168 = vperm.slane %v162, 0
      %v169 = vmul.f32 %v151, %v166
      %v170 = vmul.f32 %v151, %v167
      %v171 = vmul.f32 %v151, %v168
      %v172 = vmul.f32 %v156, %v166
      %v173 = vmul.f32 %v156, %v167
      %v174 = vmul.f32 %v156, %v168
      %v175 = vadd.f32 %v169, 0.0
      %v176 = vadd.f32 %v170, 0.0
      %v177 = vadd.f32 %v171, 0.0
      %v178 = vadd.f32 %v172, 0.0
      %v179 = vadd.f32 %v173, 0.0
      %v180 = vadd.f32 %v174, 0.0
      %181 = vset.pattern.permute.xlu0 1
      %182 = vperm.xlu0 %181, %v146
      %v183 = vpop.permute.xlu0 %182
      %185 = vset.pattern.permute.xlu0 1
      %186 = vperm.xlu0 %185, %v147
      %v187 = vpop.permute.xlu0 %186
      %v189 = vmul.f32 %v183, %v166
      %v190 = vmul.f32 %v183, %v167
      %v191 = vmul.f32 %v183, %v168
      %v192 = vmul.f32 %v187, %v166
      %v193 = vmul.f32 %v187, %v167
      %v194 = vmul.f32 %v187, %v168
      %v195 = vadd.f32 %v189, 0.0
      %v196 = vadd.f32 %v190, 0.0
      %v197 = vadd.f32 %v191, 0.0
      %v198 = vadd.f32 %v192, 0.0
      %v199 = vadd.f32 %v193, 0.0
      %v200 = vadd.f32 %v194, 0.0
      %201 = vset.pattern.permute.xlu0 2
      %202 = vperm.xlu0 %201, %v146
      %v203 = vpop.permute.xlu0 %202
      %205 = vset.pattern.permute.xlu0 2
      %206 = vperm.xlu0 %205, %v147
      %v207 = vpop.permute.xlu0 %206
      %v209 = vmul.f32 %v203, %v166
      %v210 = vmul.f32 %v203, %v167
      %v211 = vmul.f32 %v203, %v168
      %v212 = vmul.f32 %v207, %v166
      %v213 = vmul.f32 %v207, %v167
      %v214 = vmul.f32 %v207, %v168
      %v215 = vadd.f32 %v209, 0.0
      %v216 = vadd.f32 %v210, 0.0
      %v217 = vadd.f32 %v211, 0.0
      %v218 = vadd.f32 %v212, 0.0
      %v219 = vadd.f32 %v213, 0.0
      %v220 = vadd.f32 %v214, 0.0
      %221 = vset.pattern.permute.xlu0 3
      %222 = vperm.xlu0 %221, %v146
      %v223 = vpop.permute.xlu0 %222
      %225 = vset.pattern.permute.xlu0 3
      %226 = vperm.xlu0 %225, %v147
      %v227 = vpop.permute.xlu0 %226
      %v229 = vmul.f32 %v223, %v166
      %v230 = vmul.f32 %v223, %v167
      %v231 = vmul.f32 %v223, %v168
      %v232 = vmul.f32 %v227, %v166
      %v233 = vmul.f32 %v227, %v167
      %v234 = vmul.f32 %v227, %v168
      %241 = vrot.lane.b32.xlu0 %v229, 110
      %v242 = vpop.permute.xlu0 %241
      %243 = vrot.lane.b32.xlu0 %v230, 110
      %v244 = vpop.permute.xlu0 %243
      %245 = vrot.lane.b32.xlu0 %v231, 110
      %v246 = vpop.permute.xlu0 %245
      %247 = vrot.lane.b32.xlu0 %v232, 110
      %v248 = vpop.permute.xlu0 %247
      %249 = vrot.lane.b32.xlu0 %v233, 110
      %v250 = vpop.permute.xlu0 %249
      %251 = vrot.lane.b32.xlu0 %v234, 110
      %v252 = vpop.permute.xlu0 %251
      %vm253 = vcmask 900096
      %v254 = vsel %vm253, %v242, %v244
      %v255 = vsel %vm253, %v244, %v246
      %v256 = vsel %vm253, %v248, %v250
      %v257 = vsel %vm253, %v250, %v252
      %v264 = vadd.f32 %v175, %v254
      %v265 = vadd.f32 %v176, %v255
      %v266 = vadd.f32 %v177, %v246
      %v267 = vadd.f32 %v178, %v256
      %v268 = vadd.f32 %v179, %v257
      %v269 = vadd.f32 %v180, %v252
      %270 = vset.pattern.permute.xlu0 4
      %271 = vperm.xlu0 %270, %v146
      %v272 = vpop.permute.xlu0 %271
      %274 = vset.pattern.permute.xlu0 4
      %275 = vperm.xlu0 %274, %v147
      %v276 = vpop.permute.xlu0 %275
      %v278 = vmul.f32 %v272, %v166
      %v279 = vmul.f32 %v272, %v167
      %v280 = vmul.f32 %v272, %v168
      %v281 = vmul.f32 %v276, %v166
      %v282 = vmul.f32 %v276, %v167
      %v283 = vmul.f32 %v276, %v168
      %290 = vrot.lane.b32.xlu0 %v278, 110
      %v291 = vpop.permute.xlu0 %290
      %292 = vrot.lane.b32.xlu0 %v279, 110
      %v293 = vpop.permute.xlu0 %292
      %294 = vrot.lane.b32.xlu0 %v280, 110
      %v295 = vpop.permute.xlu0 %294
      %296 = vrot.lane.b32.xlu0 %v281, 110
      %v297 = vpop.permute.xlu0 %296
      %298 = vrot.lane.b32.xlu0 %v282, 110
      %v299 = vpop.permute.xlu0 %298
      %300 = vrot.lane.b32.xlu0 %v283, 110
      %v301 = vpop.permute.xlu0 %300
      %v302 = vsel %vm253, %v291, %v293
      %v303 = vsel %vm253, %v293, %v295
      %v304 = vsel %vm253, %v297, %v299
      %v305 = vsel %vm253, %v299, %v301
      %v312 = vadd.f32 %v195, %v302
      %v313 = vadd.f32 %v196, %v303
      %v314 = vadd.f32 %v197, %v295
      %v315 = vadd.f32 %v198, %v304
      %v316 = vadd.f32 %v199, %v305
      %v317 = vadd.f32 %v200, %v301
      %318 = vset.pattern.permute.xlu0 5
      %319 = vperm.xlu0 %318, %v146
      %v320 = vpop.permute.xlu0 %319
      %322 = vset.pattern.permute.xlu0 5
      %323 = vperm.xlu0 %322, %v147
      %v324 = vpop.permute.xlu0 %323
      %v326 = vmul.f32 %v320, %v166
      %v327 = vmul.f32 %v320, %v167
      %v328 = vmul.f32 %v320, %v168
      %v329 = vmul.f32 %v324, %v166
      %v330 = vmul.f32 %v324, %v167
      %v331 = vmul.f32 %v324, %v168
      %338 = vrot.lane.b32.xlu0 %v326, 110
      %v339 = vpop.permute.xlu0 %338
      %340 = vrot.lane.b32.xlu0 %v327, 110
      %v341 = vpop.permute.xlu0 %340
      %342 = vrot.lane.b32.xlu0 %v328, 110
      %v343 = vpop.permute.xlu0 %342
      %344 = vrot.lane.b32.xlu0 %v329, 110
      %v345 = vpop.permute.xlu0 %344
      %346 = vrot.lane.b32.xlu0 %v330, 110
      %v347 = vpop.permute.xlu0 %346
      %348 = vrot.lane.b32.xlu0 %v331, 110
      %v349 = vpop.permute.xlu0 %348
      %v350 = vsel %vm253, %v339, %v341
      %v351 = vsel %vm253, %v341, %v343
      %v352 = vsel %vm253, %v345, %v347
      %v353 = vsel %vm253, %v347, %v349
      %v360 = vadd.f32 %v215, %v350
      %v361 = vadd.f32 %v216, %v351
      %v362 = vadd.f32 %v217, %v343
      %v363 = vadd.f32 %v218, %v352
      %v364 = vadd.f32 %v219, %v353
      %v365 = vadd.f32 %v220, %v349
      %366 = vset.pattern.permute.xlu0 6
      %367 = vperm.xlu0 %366, %v146
      %v368 = vpop.permute.xlu0 %367
      %370 = vset.pattern.permute.xlu0 6
      %371 = vperm.xlu0 %370, %v147
      %v372 = vpop.permute.xlu0 %371
      %v374 = vmul.f32 %v368, %v166
      %v375 = vmul.f32 %v368, %v167
      %v376 = vmul.f32 %v368, %v168
      %v377 = vmul.f32 %v372, %v166
      %v378 = vmul.f32 %v372, %v167
      %v379 = vmul.f32 %v372, %v168
      %386 = vrot.lane.b32.xlu0 %v374, 92
      %v387 = vpop.permute.xlu0 %386
      %388 = vrot.lane.b32.xlu0 %v375, 92
      %v389 = vpop.permute.xlu0 %388
      %390 = vrot.lane.b32.xlu0 %v376, 92
      %v391 = vpop.permute.xlu0 %390
      %392 = vrot.lane.b32.xlu0 %v377, 92
      %v393 = vpop.permute.xlu0 %392
      %394 = vrot.lane.b32.xlu0 %v378, 92
      %v395 = vpop.permute.xlu0 %394
      %396 = vrot.lane.b32.xlu0 %v379, 92
      %v397 = vpop.permute.xlu0 %396
      %vm398 = vcmask 752640
      %v399 = vsel %vm398, %v387, %v389
      %v400 = vsel %vm398, %v389, %v391
      %v401 = vsel %vm398, %v393, %v395
      %v402 = vsel %vm398, %v395, %v397
      %v409 = vadd.f32 %v264, %v399
      %v410 = vadd.f32 %v265, %v400
      %v411 = vadd.f32 %v266, %v391
      %v412 = vadd.f32 %v267, %v401
      %v413 = vadd.f32 %v268, %v402
      %v414 = vadd.f32 %v269, %v397
      %415 = vset.pattern.permute.xlu0 7
      %416 = vperm.xlu0 %415, %v146
      %v417 = vpop.permute.xlu0 %416
      %419 = vset.pattern.permute.xlu0 7
      %420 = vperm.xlu0 %419, %v147
      %v421 = vpop.permute.xlu0 %420
      %v423 = vmul.f32 %v417, %v166
      %v424 = vmul.f32 %v417, %v167
      %v425 = vmul.f32 %v417, %v168
      %v426 = vmul.f32 %v421, %v166
      %v427 = vmul.f32 %v421, %v167
      %v428 = vmul.f32 %v421, %v168
      %435 = vrot.lane.b32.xlu0 %v423, 92
      %v436 = vpop.permute.xlu0 %435
      %437 = vrot.lane.b32.xlu0 %v424, 92
      %v438 = vpop.permute.xlu0 %437
      %439 = vrot.lane.b32.xlu0 %v425, 92
      %v440 = vpop.permute.xlu0 %439
      %441 = vrot.lane.b32.xlu0 %v426, 92
      %v442 = vpop.permute.xlu0 %441
      %443 = vrot.lane.b32.xlu0 %v427, 92
      %v444 = vpop.permute.xlu0 %443
      %445 = vrot.lane.b32.xlu0 %v428, 92
      %v446 = vpop.permute.xlu0 %445
      %v447 = vsel %vm398, %v436, %v438
      %v448 = vsel %vm398, %v438, %v440
      %v449 = vsel %vm398, %v442, %v444
      %v450 = vsel %vm398, %v444, %v446
      %v457 = vadd.f32 %v312, %v447
      %v458 = vadd.f32 %v313, %v448
      %v459 = vadd.f32 %v314, %v440
      %v460 = vadd.f32 %v315, %v449
      %v461 = vadd.f32 %v316, %v450
      %v462 = vadd.f32 %v317, %v446
      %463 = vset.pattern.permute.xlu0 8
      %464 = vperm.xlu0 %463, %v146
      %v465 = vpop.permute.xlu0 %464
      %467 = vset.pattern.permute.xlu0 8
      %468 = vperm.xlu0 %467, %v147
      %v469 = vpop.permute.xlu0 %468
      %v471 = vmul.f32 %v465, %v166
      %v472 = vmul.f32 %v465, %v167
      %v473 = vmul.f32 %v465, %v168
      %v474 = vmul.f32 %v469, %v166
      %v475 = vmul.f32 %v469, %v167
      %v476 = vmul.f32 %v469, %v168
      %483 = vrot.lane.b32.xlu0 %v471, 92
      %v484 = vpop.permute.xlu0 %483
      %485 = vrot.lane.b32.xlu0 %v472, 92
      %v486 = vpop.permute.xlu0 %485
      %487 = vrot.lane.b32.xlu0 %v473, 92
      %v488 = vpop.permute.xlu0 %487
      %489 = vrot.lane.b32.xlu0 %v474, 92
      %v490 = vpop.permute.xlu0 %489
      %491 = vrot.lane.b32.xlu0 %v475, 92
      %v492 = vpop.permute.xlu0 %491
      %493 = vrot.lane.b32.xlu0 %v476, 92
      %v494 = vpop.permute.xlu0 %493
      %v495 = vsel %vm398, %v484, %v486
      %v496 = vsel %vm398, %v486, %v488
      %v497 = vsel %vm398, %v490, %v492
      %v498 = vsel %vm398, %v492, %v494
      %v505 = vadd.f32 %v360, %v495
      %v506 = vadd.f32 %v361, %v496
      %v507 = vadd.f32 %v362, %v488
      %v508 = vadd.f32 %v363, %v497
      %v509 = vadd.f32 %v364, %v498
      %v510 = vadd.f32 %v365, %v494
      %511 = vset.pattern.permute.xlu0 9
      %512 = vperm.xlu0 %511, %v146
      %v513 = vpop.permute.xlu0 %512
      %515 = vset.pattern.permute.xlu0 9
      %516 = vperm.xlu0 %515, %v147
      %v517 = vpop.permute.xlu0 %516
      %v519 = vperm.slane %v144, 1
      %v520 = vperm.slane %v144, 5
      %v521 = vperm.slane %v145, 1
      %v525 = vperm.slane %v519, 1
      %v526 = vperm.slane %v520, 1
      %v527 = vperm.slane %v521, 1
      %v528 = vmul.f32 %v513, %v525
      %v529 = vmul.f32 %v513, %v526
      %v530 = vmul.f32 %v513, %v527
      %v531 = vmul.f32 %v517, %v525
      %v532 = vmul.f32 %v517, %v526
      %v533 = vmul.f32 %v517, %v527
      %v534 = vadd.f32 %v409, %v528
      %v535 = vadd.f32 %v410, %v529
      %v536 = vadd.f32 %v411, %v530
      %v537 = vadd.f32 %v412, %v531
      %v538 = vadd.f32 %v413, %v532
      %v539 = vadd.f32 %v414, %v533
      %540 = vset.pattern.permute.xlu0 10
      %541 = vperm.xlu0 %540, %v146
      %v542 = vpop.permute.xlu0 %541
      %544 = vset.pattern.permute.xlu0 10
      %545 = vperm.xlu0 %544, %v147
      %v546 = vpop.permute.xlu0 %545
      %v548 = vmul.f32 %v542, %v525
      %v549 = vmul.f32 %v542, %v526
      %v550 = vmul.f32 %v542, %v527
      %v551 = vmul.f32 %v546, %v525
      %v552 = vmul.f32 %v546, %v526
      %v553 = vmul.f32 %v546, %v527
      %v554 = vadd.f32 %v457, %v548
      %v555 = vadd.f32 %v458, %v549
      %v556 = vadd.f32 %v459, %v550
      %v557 = vadd.f32 %v460, %v551
      %v558 = vadd.f32 %v461, %v552
      %v559 = vadd.f32 %v462, %v553
      %560 = vset.pattern.permute.xlu0 11
      %561 = vperm.xlu0 %560, %v146
      %v562 = vpop.permute.xlu0 %561
      %564 = vset.pattern.permute.xlu0 11
      %565 = vperm.xlu0 %564, %v147
      %v566 = vpop.permute.xlu0 %565
      %v568 = vmul.f32 %v562, %v525
      %v569 = vmul.f32 %v562, %v526
      %v570 = vmul.f32 %v562, %v527
      %v571 = vmul.f32 %v566, %v525
      %v572 = vmul.f32 %v566, %v526
      %v573 = vmul.f32 %v566, %v527
      %v574 = vadd.f32 %v505, %v568
      %v575 = vadd.f32 %v506, %v569
      %v576 = vadd.f32 %v507, %v570
      %v577 = vadd.f32 %v508, %v571
      %v578 = vadd.f32 %v509, %v572
      %v579 = vadd.f32 %v510, %v573
      %580 = vset.pattern.permute.xlu0 12
      %581 = vperm.xlu0 %580, %v146
      %v582 = vpop.permute.xlu0 %581
      %584 = vset.pattern.permute.xlu0 12
      %585 = vperm.xlu0 %584, %v147
      %v586 = vpop.permute.xlu0 %585
      %v588 = vmul.f32 %v582, %v525
      %v589 = vmul.f32 %v582, %v526
      %v590 = vmul.f32 %v582, %v527
      %v591 = vmul.f32 %v586, %v525
      %v592 = vmul.f32 %v586, %v526
      %v593 = vmul.f32 %v586, %v527
      %600 = vrot.lane.b32.xlu0 %v588, 110
      %v601 = vpop.permute.xlu0 %600
      %602 = vrot.lane.b32.xlu0 %v589, 110
      %v603 = vpop.permute.xlu0 %602
      %604 = vrot.lane.b32.xlu0 %v590, 110
      %v605 = vpop.permute.xlu0 %604
      %606 = vrot.lane.b32.xlu0 %v591, 110
      %v607 = vpop.permute.xlu0 %606
      %608 = vrot.lane.b32.xlu0 %v592, 110
      %v609 = vpop.permute.xlu0 %608
      %610 = vrot.lane.b32.xlu0 %v593, 110
      %v611 = vpop.permute.xlu0 %610
      %v612 = vsel %vm253, %v601, %v603
      %v613 = vsel %vm253, %v603, %v605
      %v614 = vsel %vm253, %v607, %v609
      %v615 = vsel %vm253, %v609, %v611
      %v622 = vadd.f32 %v534, %v612
      %v623 = vadd.f32 %v535, %v613
      %v624 = vadd.f32 %v536, %v605
      %v625 = vadd.f32 %v537, %v614
      %v626 = vadd.f32 %v538, %v615
      %v627 = vadd.f32 %v539, %v611
      %628 = vset.pattern.permute.xlu0 13
      %629 = vperm.xlu0 %628, %v146
      %v630 = vpop.permute.xlu0 %629
      %632 = vset.pattern.permute.xlu0 13
      %633 = vperm.xlu0 %632, %v147
      %v634 = vpop.permute.xlu0 %633
      %v636 = vmul.f32 %v630, %v525
      %v637 = vmul.f32 %v630, %v526
      %v638 = vmul.f32 %v630, %v527
      %v639 = vmul.f32 %v634, %v525
      %v640 = vmul.f32 %v634, %v526
      %v641 = vmul.f32 %v634, %v527
      %648 = vrot.lane.b32.xlu0 %v636, 110
      %v649 = vpop.permute.xlu0 %648
      %650 = vrot.lane.b32.xlu0 %v637, 110
      %v651 = vpop.permute.xlu0 %650
      %652 = vrot.lane.b32.xlu0 %v638, 110
      %v653 = vpop.permute.xlu0 %652
      %654 = vrot.lane.b32.xlu0 %v639, 110
      %v655 = vpop.permute.xlu0 %654
      %656 = vrot.lane.b32.xlu0 %v640, 110
      %v657 = vpop.permute.xlu0 %656
      %658 = vrot.lane.b32.xlu0 %v641, 110
      %v659 = vpop.permute.xlu0 %658
      %v660 = vsel %vm253, %v649, %v651
      %v661 = vsel %vm253, %v651, %v653
      %v662 = vsel %vm253, %v655, %v657
      %v663 = vsel %vm253, %v657, %v659
      %v670 = vadd.f32 %v554, %v660
      %v671 = vadd.f32 %v555, %v661
      %v672 = vadd.f32 %v556, %v653
      %v673 = vadd.f32 %v557, %v662
      %v674 = vadd.f32 %v558, %v663
      %v675 = vadd.f32 %v559, %v659
      %676 = vset.pattern.permute.xlu0 14
      %677 = vperm.xlu0 %676, %v146
      %v678 = vpop.permute.xlu0 %677
      %680 = vset.pattern.permute.xlu0 14
      %681 = vperm.xlu0 %680, %v147
      %v682 = vpop.permute.xlu0 %681
      %v684 = vmul.f32 %v678, %v525
      %v685 = vmul.f32 %v678, %v526
      %v686 = vmul.f32 %v678, %v527
      %v687 = vmul.f32 %v682, %v525
      %v688 = vmul.f32 %v682, %v526
      %v689 = vmul.f32 %v682, %v527
      %696 = vrot.lane.b32.xlu0 %v684, 110
      %v697 = vpop.permute.xlu0 %696
      %698 = vrot.lane.b32.xlu0 %v685, 110
      %v699 = vpop.permute.xlu0 %698
      %700 = vrot.lane.b32.xlu0 %v686, 110
      %v701 = vpop.permute.xlu0 %700
      %702 = vrot.lane.b32.xlu0 %v687, 110
      %v703 = vpop.permute.xlu0 %702
      %704 = vrot.lane.b32.xlu0 %v688, 110
      %v705 = vpop.permute.xlu0 %704
      %706 = vrot.lane.b32.xlu0 %v689, 110
      %v707 = vpop.permute.xlu0 %706
      %v708 = vsel %vm253, %v697, %v699
      %v709 = vsel %vm253, %v699, %v701
      %v710 = vsel %vm253, %v703, %v705
      %v711 = vsel %vm253, %v705, %v707
      %v718 = vadd.f32 %v574, %v708
      %v719 = vadd.f32 %v575, %v709
      %v720 = vadd.f32 %v576, %v701
      %v721 = vadd.f32 %v577, %v710
      %v722 = vadd.f32 %v578, %v711
      %v723 = vadd.f32 %v579, %v707
      %724 = vset.pattern.permute.xlu0 15
      %725 = vperm.xlu0 %724, %v146
      %v726 = vpop.permute.xlu0 %725
      %728 = vset.pattern.permute.xlu0 15
      %729 = vperm.xlu0 %728, %v147
      %v730 = vpop.permute.xlu0 %729
      %v732 = vmul.f32 %v726, %v525
      %v733 = vmul.f32 %v726, %v526
      %v734 = vmul.f32 %v726, %v527
      %v735 = vmul.f32 %v730, %v525
      %v736 = vmul.f32 %v730, %v526
      %v737 = vmul.f32 %v730, %v527
      %744 = vrot.lane.b32.xlu0 %v732, 92
      %v745 = vpop.permute.xlu0 %744
      %746 = vrot.lane.b32.xlu0 %v733, 92
      %v747 = vpop.permute.xlu0 %746
      %748 = vrot.lane.b32.xlu0 %v734, 92
      %v749 = vpop.permute.xlu0 %748
      %750 = vrot.lane.b32.xlu0 %v735, 92
      %v751 = vpop.permute.xlu0 %750
      %752 = vrot.lane.b32.xlu0 %v736, 92
      %v753 = vpop.permute.xlu0 %752
      %754 = vrot.lane.b32.xlu0 %v737, 92
      %v755 = vpop.permute.xlu0 %754
      %v756 = vsel %vm398, %v745, %v747
      %v757 = vsel %vm398, %v747, %v749
      %v758 = vsel %vm398, %v751, %v753
      %v759 = vsel %vm398, %v753, %v755
      %v766 = vadd.f32 %v622, %v756
      %v767 = vadd.f32 %v623, %v757
      %v768 = vadd.f32 %v624, %v749
      %v769 = vadd.f32 %v625, %v758
      %v770 = vadd.f32 %v626, %v759
      %v771 = vadd.f32 %v627, %v755
      %772 = vset.pattern.permute.xlu0 16
      %773 = vperm.xlu0 %772, %v146
      %v774 = vpop.permute.xlu0 %773
      %776 = vset.pattern.permute.xlu0 16
      %777 = vperm.xlu0 %776, %v147
      %v778 = vpop.permute.xlu0 %777
      %v780 = vmul.f32 %v774, %v525
      %v781 = vmul.f32 %v774, %v526
      %v782 = vmul.f32 %v774, %v527
      %v783 = vmul.f32 %v778, %v525
      %v784 = vmul.f32 %v778, %v526
      %v785 = vmul.f32 %v778, %v527
      %792 = vrot.lane.b32.xlu0 %v780, 92
      %v793 = vpop.permute.xlu0 %792
      %794 = vrot.lane.b32.xlu0 %v781, 92
      %v795 = vpop.permute.xlu0 %794
      %796 = vrot.lane.b32.xlu0 %v782, 92
      %v797 = vpop.permute.xlu0 %796
      %798 = vrot.lane.b32.xlu0 %v783, 92
      %v799 = vpop.permute.xlu0 %798
      %800 = vrot.lane.b32.xlu0 %v784, 92
      %v801 = vpop.permute.xlu0 %800
      %802 = vrot.lane.b32.xlu0 %v785, 92
      %v803 = vpop.permute.xlu0 %802
      %v804 = vsel %vm398, %v793, %v795
      %v805 = vsel %vm398, %v795, %v797
      %v806 = vsel %vm398, %v799, %v801
      %v807 = vsel %vm398, %v801, %v803
      %v814 = vadd.f32 %v670, %v804
      %v815 = vadd.f32 %v671, %v805
      %v816 = vadd.f32 %v672, %v797
      %v817 = vadd.f32 %v673, %v806
      %v818 = vadd.f32 %v674, %v807
      %v819 = vadd.f32 %v675, %v803
      %820 = vset.pattern.permute.xlu0 17
      %821 = vperm.xlu0 %820, %v146
      %v822 = vpop.permute.xlu0 %821
      %824 = vset.pattern.permute.xlu0 17
      %825 = vperm.xlu0 %824, %v147
      %v826 = vpop.permute.xlu0 %825
      %v828 = vmul.f32 %v822, %v525
      %v829 = vmul.f32 %v822, %v526
      %v830 = vmul.f32 %v822, %v527
      %v831 = vmul.f32 %v826, %v525
      %v832 = vmul.f32 %v826, %v526
      %v833 = vmul.f32 %v826, %v527
      %840 = vrot.lane.b32.xlu0 %v828, 92
      %v841 = vpop.permute.xlu0 %840
      %842 = vrot.lane.b32.xlu0 %v829, 92
      %v843 = vpop.permute.xlu0 %842
      %844 = vrot.lane.b32.xlu0 %v830, 92
      %v845 = vpop.permute.xlu0 %844
      %846 = vrot.lane.b32.xlu0 %v831, 92
      %v847 = vpop.permute.xlu0 %846
      %848 = vrot.lane.b32.xlu0 %v832, 92
      %v849 = vpop.permute.xlu0 %848
      %850 = vrot.lane.b32.xlu0 %v833, 92
      %v851 = vpop.permute.xlu0 %850
      %v852 = vsel %vm398, %v841, %v843
      %v853 = vsel %vm398, %v843, %v845
      %v854 = vsel %vm398, %v847, %v849
      %v855 = vsel %vm398, %v849, %v851
      %v862 = vadd.f32 %v718, %v852
      %v863 = vadd.f32 %v719, %v853
      %v864 = vadd.f32 %v720, %v845
      %v865 = vadd.f32 %v721, %v854
      %v866 = vadd.f32 %v722, %v855
      %v867 = vadd.f32 %v723, %v851
      %868 = vset.pattern.permute.xlu0 18
      %869 = vperm.xlu0 %868, %v146
      %v870 = vpop.permute.xlu0 %869
      %872 = vset.pattern.permute.xlu0 18
      %873 = vperm.xlu0 %872, %v147
      %v874 = vpop.permute.xlu0 %873
      %v876 = vperm.slane %v144, 2
      %v877 = vperm.slane %v144, 6
      %v878 = vperm.slane %v145, 2
      %v882 = vperm.slane %v876, 2
      %v883 = vperm.slane %v877, 2
      %v884 = vperm.slane %v878, 2
      %v885 = vmul.f32 %v870, %v882
      %v886 = vmul.f32 %v870, %v883
      %v887 = vmul.f32 %v870, %v884
      %v888 = vmul.f32 %v874, %v882
      %v889 = vmul.f32 %v874, %v883
      %v890 = vmul.f32 %v874, %v884
      %v891 = vadd.f32 %v766, %v885
      %v892 = vadd.f32 %v767, %v886
      %v893 = vadd.f32 %v768, %v887
      %v894 = vadd.f32 %v769, %v888
      %v895 = vadd.f32 %v770, %v889
      %v896 = vadd.f32 %v771, %v890
      %897 = vset.pattern.permute.xlu0 19
      %898 = vperm.xlu0 %897, %v146
      %v899 = vpop.permute.xlu0 %898
      %901 = vset.pattern.permute.xlu0 19
      %902 = vperm.xlu0 %901, %v147
      %v903 = vpop.permute.xlu0 %902
      %v905 = vmul.f32 %v899, %v882
      %v906 = vmul.f32 %v899, %v883
      %v907 = vmul.f32 %v899, %v884
      %v908 = vmul.f32 %v903, %v882
      %v909 = vmul.f32 %v903, %v883
      %v910 = vmul.f32 %v903, %v884
      %v911 = vadd.f32 %v814, %v905
      %v912 = vadd.f32 %v815, %v906
      %v913 = vadd.f32 %v816, %v907
      %v914 = vadd.f32 %v817, %v908
      %v915 = vadd.f32 %v818, %v909
      %v916 = vadd.f32 %v819, %v910
      %917 = vset.pattern.permute.xlu0 20
      %918 = vperm.xlu0 %917, %v146
      %v919 = vpop.permute.xlu0 %918
      %921 = vset.pattern.permute.xlu0 20
      %922 = vperm.xlu0 %921, %v147
      %v923 = vpop.permute.xlu0 %922
      %v925 = vmul.f32 %v919, %v882
      %v926 = vmul.f32 %v919, %v883
      %v927 = vmul.f32 %v919, %v884
      %v928 = vmul.f32 %v923, %v882
      %v929 = vmul.f32 %v923, %v883
      %v930 = vmul.f32 %v923, %v884
      %v931 = vadd.f32 %v862, %v925
      %v932 = vadd.f32 %v863, %v926
      %v933 = vadd.f32 %v864, %v927
      %v934 = vadd.f32 %v865, %v928
      %v935 = vadd.f32 %v866, %v929
      %v936 = vadd.f32 %v867, %v930
      %937 = vset.pattern.permute.xlu0 21
      %938 = vperm.xlu0 %937, %v146
      %v939 = vpop.permute.xlu0 %938
      %941 = vset.pattern.permute.xlu0 21
      %942 = vperm.xlu0 %941, %v147
      %v943 = vpop.permute.xlu0 %942
      %v945 = vmul.f32 %v939, %v882
      %v946 = vmul.f32 %v939, %v883
      %v947 = vmul.f32 %v939, %v884
      %v948 = vmul.f32 %v943, %v882
      %v949 = vmul.f32 %v943, %v883
      %v950 = vmul.f32 %v943, %v884
      %957 = vrot.lane.b32.xlu0 %v945, 110
      %v958 = vpop.permute.xlu0 %957
      %959 = vrot.lane.b32.xlu0 %v946, 110
      %v960 = vpop.permute.xlu0 %959
      %961 = vrot.lane.b32.xlu0 %v947, 110
      %v962 = vpop.permute.xlu0 %961
      %963 = vrot.lane.b32.xlu0 %v948, 110
      %v964 = vpop.permute.xlu0 %963
      %965 = vrot.lane.b32.xlu0 %v949, 110
      %v966 = vpop.permute.xlu0 %965
      %967 = vrot.lane.b32.xlu0 %v950, 110
      %v968 = vpop.permute.xlu0 %967
      %v969 = vsel %vm253, %v958, %v960
      %v970 = vsel %vm253, %v960, %v962
      %v971 = vsel %vm253, %v964, %v966
      %v972 = vsel %vm253, %v966, %v968
      %v979 = vadd.f32 %v891, %v969
      %v980 = vadd.f32 %v892, %v970
      %v981 = vadd.f32 %v893, %v962
      %v982 = vadd.f32 %v894, %v971
      %v983 = vadd.f32 %v895, %v972
      %v984 = vadd.f32 %v896, %v968
      %985 = vset.pattern.permute.xlu0 22
      %986 = vperm.xlu0 %985, %v146
      %v987 = vpop.permute.xlu0 %986
      %989 = vset.pattern.permute.xlu0 22
      %990 = vperm.xlu0 %989, %v147
      %v991 = vpop.permute.xlu0 %990
      %v993 = vmul.f32 %v987, %v882
      %v994 = vmul.f32 %v987, %v883
      %v995 = vmul.f32 %v987, %v884
      %v996 = vmul.f32 %v991, %v882
      %v997 = vmul.f32 %v991, %v883
      %v998 = vmul.f32 %v991, %v884
      %1005 = vrot.lane.b32.xlu0 %v993, 110
      %v1006 = vpop.permute.xlu0 %1005
      %1007 = vrot.lane.b32.xlu0 %v994, 110
      %v1008 = vpop.permute.xlu0 %1007
      %1009 = vrot.lane.b32.xlu0 %v995, 110
      %v1010 = vpop.permute.xlu0 %1009
      %1011 = vrot.lane.b32.xlu0 %v996, 110
      %v1012 = vpop.permute.xlu0 %1011
      %1013 = vrot.lane.b32.xlu0 %v997, 110
      %v1014 = vpop.permute.xlu0 %1013
      %1015 = vrot.lane.b32.xlu0 %v998, 110
      %v1016 = vpop.permute.xlu0 %1015
      %v1017 = vsel %vm253, %v1006, %v1008
      %v1018 = vsel %vm253, %v1008, %v1010
      %v1019 = vsel %vm253, %v1012, %v1014
      %v1020 = vsel %vm253, %v1014, %v1016
      %v1027 = vadd.f32 %v911, %v1017
      %v1028 = vadd.f32 %v912, %v1018
      %v1029 = vadd.f32 %v913, %v1010
      %v1030 = vadd.f32 %v914, %v1019
      %v1031 = vadd.f32 %v915, %v1020
      %v1032 = vadd.f32 %v916, %v1016
      %1033 = vset.pattern.permute.xlu0 23
      %1034 = vperm.xlu0 %1033, %v146
      %v1035 = vpop.permute.xlu0 %1034
      %1037 = vset.pattern.permute.xlu0 23
      %1038 = vperm.xlu0 %1037, %v147
      %v1039 = vpop.permute.xlu0 %1038
      %v1041 = vmul.f32 %v1035, %v882
      %v1042 = vmul.f32 %v1035, %v883
      %v1043 = vmul.f32 %v1035, %v884
      %v1044 = vmul.f32 %v1039, %v882
      %v1045 = vmul.f32 %v1039, %v883
      %v1046 = vmul.f32 %v1039, %v884
      %1053 = vrot.lane.b32.xlu0 %v1041, 110
      %v1054 = vpop.permute.xlu0 %1053
      %1055 = vrot.lane.b32.xlu0 %v1042, 110
      %v1056 = vpop.permute.xlu0 %1055
      %1057 = vrot.lane.b32.xlu0 %v1043, 110
      %v1058 = vpop.permute.xlu0 %1057
      %1059 = vrot.lane.b32.xlu0 %v1044, 110
      %v1060 = vpop.permute.xlu0 %1059
      %1061 = vrot.lane.b32.xlu0 %v1045, 110
      %v1062 = vpop.permute.xlu0 %1061
      %1063 = vrot.lane.b32.xlu0 %v1046, 110
      %v1064 = vpop.permute.xlu0 %1063
      %v1065 = vsel %vm253, %v1054, %v1056
      %v1066 = vsel %vm253, %v1056, %v1058
      %v1067 = vsel %vm253, %v1060, %v1062
      %v1068 = vsel %vm253, %v1062, %v1064
      %v1075 = vadd.f32 %v931, %v1065
      %v1076 = vadd.f32 %v932, %v1066
      %v1077 = vadd.f32 %v933, %v1058
      %v1078 = vadd.f32 %v934, %v1067
      %v1079 = vadd.f32 %v935, %v1068
      %v1080 = vadd.f32 %v936, %v1064
      %1081 = vset.pattern.permute.xlu0 24
      %1082 = vperm.xlu0 %1081, %v146
      %v1083 = vpop.permute.xlu0 %1082
      %1085 = vset.pattern.permute.xlu0 24
      %1086 = vperm.xlu0 %1085, %v147
      %v1087 = vpop.permute.xlu0 %1086
      %v1089 = vmul.f32 %v1083, %v882
      %v1090 = vmul.f32 %v1083, %v883
      %v1091 = vmul.f32 %v1083, %v884
      %v1092 = vmul.f32 %v1087, %v882
      %v1093 = vmul.f32 %v1087, %v883
      %v1094 = vmul.f32 %v1087, %v884
      %1101 = vrot.lane.b32.xlu0 %v1089, 92
      %v1102 = vpop.permute.xlu0 %1101
      %1103 = vrot.lane.b32.xlu0 %v1090, 92
      %v1104 = vpop.permute.xlu0 %1103
      %1105 = vrot.lane.b32.xlu0 %v1091, 92
      %v1106 = vpop.permute.xlu0 %1105
      %1107 = vrot.lane.b32.xlu0 %v1092, 92
      %v1108 = vpop.permute.xlu0 %1107
      %1109 = vrot.lane.b32.xlu0 %v1093, 92
      %v1110 = vpop.permute.xlu0 %1109
      %1111 = vrot.lane.b32.xlu0 %v1094, 92
      %v1112 = vpop.permute.xlu0 %1111
      %v1113 = vsel %vm398, %v1102, %v1104
      %v1114 = vsel %vm398, %v1104, %v1106
      %v1115 = vsel %vm398, %v1108, %v1110
      %v1116 = vsel %vm398, %v1110, %v1112
      %v1123 = vadd.f32 %v979, %v1113
      %v1124 = vadd.f32 %v980, %v1114
      %v1125 = vadd.f32 %v981, %v1106
      %v1126 = vadd.f32 %v982, %v1115
      %v1127 = vadd.f32 %v983, %v1116
      %v1128 = vadd.f32 %v984, %v1112
      %1129 = vset.pattern.permute.xlu0 25
      %1130 = vperm.xlu0 %1129, %v146
      %v1131 = vpop.permute.xlu0 %1130
      %1133 = vset.pattern.permute.xlu0 25
      %1134 = vperm.xlu0 %1133, %v147
      %v1135 = vpop.permute.xlu0 %1134
      %v1137 = vmul.f32 %v1131, %v882
      %v1138 = vmul.f32 %v1131, %v883
      %v1139 = vmul.f32 %v1131, %v884
      %v1140 = vmul.f32 %v1135, %v882
      %v1141 = vmul.f32 %v1135, %v883
      %v1142 = vmul.f32 %v1135, %v884
      %1149 = vrot.lane.b32.xlu0 %v1137, 92
      %v1150 = vpop.permute.xlu0 %1149
      %1151 = vrot.lane.b32.xlu0 %v1138, 92
      %v1152 = vpop.permute.xlu0 %1151
      %1153 = vrot.lane.b32.xlu0 %v1139, 92
      %v1154 = vpop.permute.xlu0 %1153
      %1155 = vrot.lane.b32.xlu0 %v1140, 92
      %v1156 = vpop.permute.xlu0 %1155
      %1157 = vrot.lane.b32.xlu0 %v1141, 92
      %v1158 = vpop.permute.xlu0 %1157
      %1159 = vrot.lane.b32.xlu0 %v1142, 92
      %v1160 = vpop.permute.xlu0 %1159
      %v1161 = vsel %vm398, %v1150, %v1152
      %v1162 = vsel %vm398, %v1152, %v1154
      %v1163 = vsel %vm398, %v1156, %v1158
      %v1164 = vsel %vm398, %v1158, %v1160
      %v1171 = vadd.f32 %v1027, %v1161
      %v1172 = vadd.f32 %v1028, %v1162
      %v1173 = vadd.f32 %v1029, %v1154
      %v1174 = vadd.f32 %v1030, %v1163
      %v1175 = vadd.f32 %v1031, %v1164
      %v1176 = vadd.f32 %v1032, %v1160
      %1177 = vset.pattern.permute.xlu0 26
      %1178 = vperm.xlu0 %1177, %v146
      %v1179 = vpop.permute.xlu0 %1178
      %1181 = vset.pattern.permute.xlu0 26
      %1182 = vperm.xlu0 %1181, %v147
      %v1183 = vpop.permute.xlu0 %1182
      %v1185 = vmul.f32 %v1179, %v882
      %v1186 = vmul.f32 %v1179, %v883
      %v1187 = vmul.f32 %v1179, %v884
      %v1188 = vmul.f32 %v1183, %v882
      %v1189 = vmul.f32 %v1183, %v883
      %v1190 = vmul.f32 %v1183, %v884
      %1197 = vrot.lane.b32.xlu0 %v1185, 92
      %v1198 = vpop.permute.xlu0 %1197
      %1199 = vrot.lane.b32.xlu0 %v1186, 92
      %v1200 = vpop.permute.xlu0 %1199
      %1201 = vrot.lane.b32.xlu0 %v1187, 92
      %v1202 = vpop.permute.xlu0 %1201
      %1203 = vrot.lane.b32.xlu0 %v1188, 92
      %v1204 = vpop.permute.xlu0 %1203
      %1205 = vrot.lane.b32.xlu0 %v1189, 92
      %v1206 = vpop.permute.xlu0 %1205
      %1207 = vrot.lane.b32.xlu0 %v1190, 92
      %v1208 = vpop.permute.xlu0 %1207
      %v1209 = vsel %vm398, %v1198, %v1200
      %v1210 = vsel %vm398, %v1200, %v1202
      %v1211 = vsel %vm398, %v1204, %v1206
      %v1212 = vsel %vm398, %v1206, %v1208
      %v1219 = vadd.f32 %v1075, %v1209
      %v1220 = vadd.f32 %v1076, %v1210
      %v1221 = vadd.f32 %v1077, %v1202
      %v1222 = vadd.f32 %v1078, %v1211
      %v1223 = vadd.f32 %v1079, %v1212
      %v1224 = vadd.f32 %v1080, %v1208
      %1225 = vset.pattern.permute.xlu0 27
      %1226 = vperm.xlu0 %1225, %v146
      %v1227 = vpop.permute.xlu0 %1226
      %1229 = vset.pattern.permute.xlu0 27
      %1230 = vperm.xlu0 %1229, %v147
      %v1231 = vpop.permute.xlu0 %1230
      %v1233 = vperm.slane %v144, 3
      %v1234 = vperm.slane %v144, 7
      %v1235 = vperm.slane %v145, 3
      %v1239 = vperm.slane %v1233, 3
      %v1240 = vperm.slane %v1234, 3
      %v1241 = vperm.slane %v1235, 3
      %v1242 = vmul.f32 %v1227, %v1239
      %v1243 = vmul.f32 %v1227, %v1240
      %v1244 = vmul.f32 %v1227, %v1241
      %v1245 = vmul.f32 %v1231, %v1239
      %v1246 = vmul.f32 %v1231, %v1240
      %v1247 = vmul.f32 %v1231, %v1241
      %v1248 = vadd.f32 %v1123, %v1242
      %v1249 = vadd.f32 %v1124, %v1243
      %v1250 = vadd.f32 %v1125, %v1244
      %v1251 = vadd.f32 %v1126, %v1245
      %v1252 = vadd.f32 %v1127, %v1246
      %v1253 = vadd.f32 %v1128, %v1247
      %1254 = vset.pattern.permute.xlu0 28
      %1255 = vperm.xlu0 %1254, %v146
      %v1256 = vpop.permute.xlu0 %1255
      %1258 = vset.pattern.permute.xlu0 28
      %1259 = vperm.xlu0 %1258, %v147
      %v1260 = vpop.permute.xlu0 %1259
      %v1262 = vmul.f32 %v1256, %v1239
      %v1263 = vmul.f32 %v1256, %v1240
      %v1264 = vmul.f32 %v1256, %v1241
      %v1265 = vmul.f32 %v1260, %v1239
      %v1266 = vmul.f32 %v1260, %v1240
      %v1267 = vmul.f32 %v1260, %v1241
      %v1268 = vadd.f32 %v1171, %v1262
      %v1269 = vadd.f32 %v1172, %v1263
      %v1270 = vadd.f32 %v1173, %v1264
      %v1271 = vadd.f32 %v1174, %v1265
      %v1272 = vadd.f32 %v1175, %v1266
      %v1273 = vadd.f32 %v1176, %v1267
      %1274 = vset.pattern.permute.xlu0 29
      %1275 = vperm.xlu0 %1274, %v146
      %v1276 = vpop.permute.xlu0 %1275
      %1278 = vset.pattern.permute.xlu0 29
      %1279 = vperm.xlu0 %1278, %v147
      %v1280 = vpop.permute.xlu0 %1279
      %v1282 = vmul.f32 %v1276, %v1239
      %v1283 = vmul.f32 %v1276, %v1240
      %v1284 = vmul.f32 %v1276, %v1241
      %v1285 = vmul.f32 %v1280, %v1239
      %v1286 = vmul.f32 %v1280, %v1240
      %v1287 = vmul.f32 %v1280, %v1241
      %v1288 = vadd.f32 %v1219, %v1282
      %v1289 = vadd.f32 %v1220, %v1283
      %v1290 = vadd.f32 %v1221, %v1284
      %v1291 = vadd.f32 %v1222, %v1285
      %v1292 = vadd.f32 %v1223, %v1286
      %v1293 = vadd.f32 %v1224, %v1287
      %1294 = vset.pattern.permute.xlu0 30
      %1295 = vperm.xlu0 %1294, %v146
      %v1296 = vpop.permute.xlu0 %1295
      %1298 = vset.pattern.permute.xlu0 30
      %1299 = vperm.xlu0 %1298, %v147
      %v1300 = vpop.permute.xlu0 %1299
      %v1302 = vmul.f32 %v1296, %v1239
      %v1303 = vmul.f32 %v1296, %v1240
      %v1304 = vmul.f32 %v1296, %v1241
      %v1305 = vmul.f32 %v1300, %v1239
      %v1306 = vmul.f32 %v1300, %v1240
      %v1307 = vmul.f32 %v1300, %v1241
      %1314 = vrot.lane.b32.xlu0 %v1302, 110
      %v1315 = vpop.permute.xlu0 %1314
      %1316 = vrot.lane.b32.xlu0 %v1303, 110
      %v1317 = vpop.permute.xlu0 %1316
      %1318 = vrot.lane.b32.xlu0 %v1304, 110
      %v1319 = vpop.permute.xlu0 %1318
      %1320 = vrot.lane.b32.xlu0 %v1305, 110
      %v1321 = vpop.permute.xlu0 %1320
      %1322 = vrot.lane.b32.xlu0 %v1306, 110
      %v1323 = vpop.permute.xlu0 %1322
      %1324 = vrot.lane.b32.xlu0 %v1307, 110
      %v1325 = vpop.permute.xlu0 %1324
      %v1326 = vsel %vm253, %v1315, %v1317
      %v1327 = vsel %vm253, %v1317, %v1319
      %v1328 = vsel %vm253, %v1321, %v1323
      %v1329 = vsel %vm253, %v1323, %v1325
      %v1336 = vadd.f32 %v1248, %v1326
      %v1337 = vadd.f32 %v1249, %v1327
      %v1338 = vadd.f32 %v1250, %v1319
      %v1339 = vadd.f32 %v1251, %v1328
      %v1340 = vadd.f32 %v1252, %v1329
      %v1341 = vadd.f32 %v1253, %v1325
      %1342 = vset.pattern.permute.xlu0 31
      %1343 = vperm.xlu0 %1342, %v146
      %v1344 = vpop.permute.xlu0 %1343
      %1346 = vset.pattern.permute.xlu0 31
      %1347 = vperm.xlu0 %1346, %v147
      %v1348 = vpop.permute.xlu0 %1347
      %v1350 = vmul.f32 %v1344, %v1239
      %v1351 = vmul.f32 %v1344, %v1240
      %v1352 = vmul.f32 %v1344, %v1241
      %v1353 = vmul.f32 %v1348, %v1239
      %v1354 = vmul.f32 %v1348, %v1240
      %v1355 = vmul.f32 %v1348, %v1241
      %1362 = vrot.lane.b32.xlu0 %v1350, 110
      %v1363 = vpop.permute.xlu0 %1362
      %1364 = vrot.lane.b32.xlu0 %v1351, 110
      %v1365 = vpop.permute.xlu0 %1364
      %1366 = vrot.lane.b32.xlu0 %v1352, 110
      %v1367 = vpop.permute.xlu0 %1366
      %1368 = vrot.lane.b32.xlu0 %v1353, 110
      %v1369 = vpop.permute.xlu0 %1368
      %1370 = vrot.lane.b32.xlu0 %v1354, 110
      %v1371 = vpop.permute.xlu0 %1370
      %1372 = vrot.lane.b32.xlu0 %v1355, 110
      %v1373 = vpop.permute.xlu0 %1372
      %v1374 = vsel %vm253, %v1363, %v1365
      %v1375 = vsel %vm253, %v1365, %v1367
      %v1376 = vsel %vm253, %v1369, %v1371
      %v1377 = vsel %vm253, %v1371, %v1373
      %v1384 = vadd.f32 %v1268, %v1374
      %v1385 = vadd.f32 %v1269, %v1375
      %v1386 = vadd.f32 %v1270, %v1367
      %v1387 = vadd.f32 %v1271, %v1376
      %v1388 = vadd.f32 %v1272, %v1377
      %v1389 = vadd.f32 %v1273, %v1373
      %1390 = vset.pattern.permute.xlu0 32
      %1391 = vperm.xlu0 %1390, %v146
      %v1392 = vpop.permute.xlu0 %1391
      %1394 = vset.pattern.permute.xlu0 32
      %1395 = vperm.xlu0 %1394, %v147
      %v1396 = vpop.permute.xlu0 %1395
      %v1398 = vmul.f32 %v1392, %v1239
      %v1399 = vmul.f32 %v1392, %v1240
      %v1400 = vmul.f32 %v1392, %v1241
      %v1401 = vmul.f32 %v1396, %v1239
      %v1402 = vmul.f32 %v1396, %v1240
      %v1403 = vmul.f32 %v1396, %v1241
      %1410 = vrot.lane.b32.xlu0 %v1398, 110
      %v1411 = vpop.permute.xlu0 %1410
      %1412 = vrot.lane.b32.xlu0 %v1399, 110
      %v1413 = vpop.permute.xlu0 %1412
      %1414 = vrot.lane.b32.xlu0 %v1400, 110
      %v1415 = vpop.permute.xlu0 %1414
      %1416 = vrot.lane.b32.xlu0 %v1401, 110
      %v1417 = vpop.permute.xlu0 %1416
      %1418 = vrot.lane.b32.xlu0 %v1402, 110
      %v1419 = vpop.permute.xlu0 %1418
      %1420 = vrot.lane.b32.xlu0 %v1403, 110
      %v1421 = vpop.permute.xlu0 %1420
      %v1422 = vsel %vm253, %v1411, %v1413
      %v1423 = vsel %vm253, %v1413, %v1415
      %v1424 = vsel %vm253, %v1417, %v1419
      %v1425 = vsel %vm253, %v1419, %v1421
      %v1432 = vadd.f32 %v1288, %v1422
      %v1433 = vadd.f32 %v1289, %v1423
      %v1434 = vadd.f32 %v1290, %v1415
      %v1435 = vadd.f32 %v1291, %v1424
      %v1436 = vadd.f32 %v1292, %v1425
      %v1437 = vadd.f32 %v1293, %v1421
      %1438 = vset.pattern.permute.xlu0 33
      %1439 = vperm.xlu0 %1438, %v146
      %v1440 = vpop.permute.xlu0 %1439
      %1442 = vset.pattern.permute.xlu0 33
      %1443 = vperm.xlu0 %1442, %v147
      %v1444 = vpop.permute.xlu0 %1443
      %v1446 = vmul.f32 %v1440, %v1239
      %v1447 = vmul.f32 %v1440, %v1240
      %v1448 = vmul.f32 %v1440, %v1241
      %v1449 = vmul.f32 %v1444, %v1239
      %v1450 = vmul.f32 %v1444, %v1240
      %v1451 = vmul.f32 %v1444, %v1241
      %1458 = vrot.lane.b32.xlu0 %v1446, 92
      %v1459 = vpop.permute.xlu0 %1458
      %1460 = vrot.lane.b32.xlu0 %v1447, 92
      %v1461 = vpop.permute.xlu0 %1460
      %1462 = vrot.lane.b32.xlu0 %v1448, 92
      %v1463 = vpop.permute.xlu0 %1462
      %1464 = vrot.lane.b32.xlu0 %v1449, 92
      %v1465 = vpop.permute.xlu0 %1464
      %1466 = vrot.lane.b32.xlu0 %v1450, 92
      %v1467 = vpop.permute.xlu0 %1466
      %1468 = vrot.lane.b32.xlu0 %v1451, 92
      %v1469 = vpop.permute.xlu0 %1468
      %v1470 = vsel %vm398, %v1459, %v1461
      %v1471 = vsel %vm398, %v1461, %v1463
      %v1472 = vsel %vm398, %v1465, %v1467
      %v1473 = vsel %vm398, %v1467, %v1469
      %v1480 = vadd.f32 %v1336, %v1470
      %v1481 = vadd.f32 %v1337, %v1471
      %v1482 = vadd.f32 %v1338, %v1463
      %v1483 = vadd.f32 %v1339, %v1472
      %v1484 = vadd.f32 %v1340, %v1473
      %v1485 = vadd.f32 %v1341, %v1469
      %1486 = vset.pattern.permute.xlu0 34
      %1487 = vperm.xlu0 %1486, %v146
      %v1488 = vpop.permute.xlu0 %1487
      %1490 = vset.pattern.permute.xlu0 34
      %1491 = vperm.xlu0 %1490, %v147
      %v1492 = vpop.permute.xlu0 %1491
      %v1494 = vmul.f32 %v1488, %v1239
      %v1495 = vmul.f32 %v1488, %v1240
      %v1496 = vmul.f32 %v1488, %v1241
      %v1497 = vmul.f32 %v1492, %v1239
      %v1498 = vmul.f32 %v1492, %v1240
      %v1499 = vmul.f32 %v1492, %v1241
      %1506 = vrot.lane.b32.xlu0 %v1494, 92
      %v1507 = vpop.permute.xlu0 %1506
      %1508 = vrot.lane.b32.xlu0 %v1495, 92
      %v1509 = vpop.permute.xlu0 %1508
      %1510 = vrot.lane.b32.xlu0 %v1496, 92
      %v1511 = vpop.permute.xlu0 %1510
      %1512 = vrot.lane.b32.xlu0 %v1497, 92
      %v1513 = vpop.permute.xlu0 %1512
      %1514 = vrot.lane.b32.xlu0 %v1498, 92
      %v1515 = vpop.permute.xlu0 %1514
      %1516 = vrot.lane.b32.xlu0 %v1499, 92
      %v1517 = vpop.permute.xlu0 %1516
      %v1518 = vsel %vm398, %v1507, %v1509
      %v1519 = vsel %vm398, %v1509, %v1511
      %v1520 = vsel %vm398, %v1513, %v1515
      %v1521 = vsel %vm398, %v1515, %v1517
      %v1528 = vadd.f32 %v1384, %v1518
      %v1529 = vadd.f32 %v1385, %v1519
      %v1530 = vadd.f32 %v1386, %v1511
      %v1531 = vadd.f32 %v1387, %v1520
      %v1532 = vadd.f32 %v1388, %v1521
      %v1533 = vadd.f32 %v1389, %v1517
      %1534 = vset.pattern.permute.xlu0 35
      %1535 = vperm.xlu0 %1534, %v146
      %v1536 = vpop.permute.xlu0 %1535
      %1538 = vset.pattern.permute.xlu0 35
      %1539 = vperm.xlu0 %1538, %v147
      %v1540 = vpop.permute.xlu0 %1539
      %v1542 = vmul.f32 %v1536, %v1239
      %v1543 = vmul.f32 %v1536, %v1240
      %v1544 = vmul.f32 %v1536, %v1241
      %v1545 = vmul.f32 %v1540, %v1239
      %v1546 = vmul.f32 %v1540, %v1240
      %v1547 = vmul.f32 %v1540, %v1241
      %1554 = vrot.lane.b32.xlu0 %v1542, 92
      %v1555 = vpop.permute.xlu0 %1554
      %1556 = vrot.lane.b32.xlu0 %v1543, 92
      %v1557 = vpop.permute.xlu0 %1556
      %1558 = vrot.lane.b32.xlu0 %v1544, 92
      %v1559 = vpop.permute.xlu0 %1558
      %1560 = vrot.lane.b32.xlu0 %v1545, 92
      %v1561 = vpop.permute.xlu0 %1560
      %1562 = vrot.lane.b32.xlu0 %v1546, 92
      %v1563 = vpop.permute.xlu0 %1562
      %1564 = vrot.lane.b32.xlu0 %v1547, 92
      %v1565 = vpop.permute.xlu0 %1564
      %v1566 = vsel %vm398, %v1555, %v1557
      %v1567 = vsel %vm398, %v1557, %v1559
      %v1568 = vsel %vm398, %v1561, %v1563
      %v1569 = vsel %vm398, %v1563, %v1565
      %v1576 = vadd.f32 %v1432, %v1566
      %v1577 = vadd.f32 %v1433, %v1567
      %v1578 = vadd.f32 %v1434, %v1559
      %v1579 = vadd.f32 %v1435, %v1568
      %v1580 = vadd.f32 %v1436, %v1569
      %v1581 = vadd.f32 %v1437, %v1565
      %1588 = vrot.lane.b32.xlu0 %v1528, 127
      %v1589 = vpop.permute.xlu0 %1588
      %1590 = vrot.lane.b32.xlu0 %v1529, 127
      %v1591 = vpop.permute.xlu0 %1590
      %1592 = vrot.lane.b32.xlu0 %v1530, 127
      %v1593 = vpop.permute.xlu0 %1592
      %1594 = vrot.lane.b32.xlu0 %v1531, 127
      %v1595 = vpop.permute.xlu0 %1594
      %1596 = vrot.lane.b32.xlu0 %v1532, 127
      %v1597 = vpop.permute.xlu0 %1596
      %1598 = vrot.lane.b32.xlu0 %v1533, 127
      %v1599 = vpop.permute.xlu0 %1598
      %vm1600 = vcmask 1039360
      %v1601 = vsel %vm1600, %v1589, %v1591
      %v1602 = vsel %vm1600, %v1591, %v1593
      %v1603 = vsel %vm1600, %v1595, %v1597
      %v1604 = vsel %vm1600, %v1597, %v1599
      %v1611 = vadd.f32 %v1480, %v1601
      %v1612 = vadd.f32 %v1481, %v1602
      %v1613 = vadd.f32 %v1482, %v1593
      %v1614 = vadd.f32 %v1483, %v1603
      %v1615 = vadd.f32 %v1484, %v1604
      %v1616 = vadd.f32 %v1485, %v1599
      %1623 = vrot.lane.b32.xlu0 %v1576, 126
      %v1624 = vpop.permute.xlu0 %1623
      %1625 = vrot.lane.b32.xlu0 %v1577, 126
      %v1626 = vpop.permute.xlu0 %1625
      %1627 = vrot.lane.b32.xlu0 %v1578, 126
      %v1628 = vpop.permute.xlu0 %1627
      %1629 = vrot.lane.b32.xlu0 %v1579, 126
      %v1630 = vpop.permute.xlu0 %1629
      %1631 = vrot.lane.b32.xlu0 %v1580, 126
      %v1632 = vpop.permute.xlu0 %1631
      %1633 = vrot.lane.b32.xlu0 %v1581, 126
      %v1634 = vpop.permute.xlu0 %1633
      %vm1635 = vcmask 1031168
      %v1636 = vsel %vm1635, %v1624, %v1626
      %v1637 = vsel %vm1635, %v1626, %v1628
      %v1638 = vsel %vm1635, %v1630, %v1632
      %v1639 = vsel %vm1635, %v1632, %v1634
      %v1646 = vadd.f32 %v1611, %v1636
      %v1647 = vadd.f32 %v1612, %v1637
      %v1648 = vadd.f32 %v1613, %v1628
      %v1649 = vadd.f32 %v1614, %v1638
      %v1650 = vadd.f32 %v1615, %v1639
      %v1651 = vadd.f32 %v1616, %v1634
      %vm1652 = vcmask 130048
      %1653 = vst.msk [vmem:[%s143] sm:$0xff] %vm1652, %v1646
      %1654 = vst.msk [vmem:[%s143 + $0x10] sm:$0xff] %vm1652, %v1649
      %1657 = vrot.lane.b32.xlu0 %v1646, 126
      %v1658 = vpop.permute.xlu0 %1657
      %1659 = vrot.lane.b32.xlu0 %v1649, 126
      %v1660 = vpop.permute.xlu0 %1659
      %vm1663 = vcmask 261248
      %1664 = vst.msk [vmem:[%s143] sm:$0xff] %vm1663, %v1658
      %1665 = vst.msk [vmem:[%s143 + $0x10] sm:$0xff] %vm1663, %v1660
      %1666 = vrot.lane.b32.xlu0 %v1646, 124
      %v1667 = vpop.permute.xlu0 %1666
      %1668 = vrot.lane.b32.xlu0 %v1649, 124
      %v1669 = vpop.permute.xlu0 %1668
      %vm1672 = vcmask 392448
      %1673 = vst.msk [vmem:[%s143] sm:$0xff] %vm1672, %v1667
      %1674 = vst.msk [vmem:[%s143 + $0x10] sm:$0xff] %vm1672, %v1669
      %1675 = vrot.lane.b32.xlu0 %v1646, 122
      %v1676 = vpop.permute.xlu0 %1675
      %1677 = vrot.lane.b32.xlu0 %v1649, 122
      %v1678 = vpop.permute.xlu0 %1677
      %vm1681 = vcmask 523648
      %1682 = vst.msk [vmem:[%s143] sm:$0xff] %vm1681, %v1676
      %1683 = vst.msk [vmem:[%s143 + $0x10] sm:$0xff] %vm1681, %v1678
      %1684 = vrot.lane.b32.xlu0 %v1646, 120
      %v1685 = vpop.permute.xlu0 %1684
      %1686 = vrot.lane.b32.xlu0 %v1649, 120
      %v1687 = vpop.permute.xlu0 %1686
      %vm1690 = vcmask 654848
      %1691 = vst.msk [vmem:[%s143] sm:$0xff] %vm1690, %v1685
      %1692 = vst.msk [vmem:[%s143 + $0x10] sm:$0xff] %vm1690, %v1687
      %1693 = vrot.lane.b32.xlu0 %v1646, 118
      %v1694 = vpop.permute.xlu0 %1693
      %1695 = vrot.lane.b32.xlu0 %v1649, 118
      %v1696 = vpop.permute.xlu0 %1695
      %vm1699 = vcmask 786048
      %1700 = vst.msk [vmem:[%s143] sm:$0xff] %vm1699, %v1694
      %1701 = vst.msk [vmem:[%s143 + $0x10] sm:$0xff] %vm1699, %v1696
      %1702 = vrot.lane.b32.xlu0 %v1646, 116
      %v1703 = vpop.permute.xlu0 %1702
      %1704 = vrot.lane.b32.xlu0 %v1649, 116
      %v1705 = vpop.permute.xlu0 %1704
      %vm1708 = vcmask 917248
      %1709 = vst.msk [vmem:[%s143] sm:$0xff] %vm1708, %v1703
      %1710 = vst.msk [vmem:[%s143 + $0x10] sm:$0xff] %vm1708, %v1705
      %1713 = vrot.lane.b32.xlu0 %v1646, 114
      %v1714 = vpop.permute.xlu0 %1713
      %1715 = vrot.lane.b32.xlu0 %v1647, 114
      %v1716 = vpop.permute.xlu0 %1715
      %1717 = vrot.lane.b32.xlu0 %v1649, 114
      %v1718 = vpop.permute.xlu0 %1717
      %1719 = vrot.lane.b32.xlu0 %v1650, 114
      %v1720 = vpop.permute.xlu0 %1719
      %vm1721 = vcmask 932864
      %v1722 = vsel %vm1721, %v1714, %v1716
      %v1723 = vsel %vm1721, %v1718, %v1720
      %vm1726 = vcmask 1048448
      %1727 = vst.msk [vmem:[%s143] sm:$0xff] %vm1726, %v1722
      %1728 = vst.msk [vmem:[%s143 + $0x10] sm:$0xff] %vm1726, %v1723
      %1729 = vrot.lane.b32.xlu0 %v1647, 112
      %v1730 = vpop.permute.xlu0 %1729
      %1731 = vrot.lane.b32.xlu0 %v1650, 112
      %v1732 = vpop.permute.xlu0 %1731
      %1735 = vst.msk [vmem:[%s143 + $0x8] sm:$0xff] %vm1652, %v1730
      %1736 = vst.msk [vmem:[%s143 + $0x18] sm:$0xff] %vm1652, %v1732
      %1737 = vrot.lane.b32.xlu0 %v1647, 110
      %v1738 = vpop.permute.xlu0 %1737
      %1739 = vrot.lane.b32.xlu0 %v1650, 110
      %v1740 = vpop.permute.xlu0 %1739
      %1743 = vst.msk [vmem:[%s143 + $0x8] sm:$0xff] %vm1663, %v1738
      %1744 = vst.msk [vmem:[%s143 + $0x18] sm:$0xff] %vm1663, %v1740
      %1745 = vrot.lane.b32.xlu0 %v1647, 108
      %v1746 = vpop.permute.xlu0 %1745
      %1747 = vrot.lane.b32.xlu0 %v1650, 108
      %v1748 = vpop.permute.xlu0 %1747
      %1751 = vst.msk [vmem:[%s143 + $0x8] sm:$0xff] %vm1672, %v1746
      %1752 = vst.msk [vmem:[%s143 + $0x18] sm:$0xff] %vm1672, %v1748
      %1753 = vrot.lane.b32.xlu0 %v1647, 106
      %v1754 = vpop.permute.xlu0 %1753
      %1755 = vrot.lane.b32.xlu0 %v1650, 106
      %v1756 = vpop.permute.xlu0 %1755
      %1759 = vst.msk [vmem:[%s143 + $0x8] sm:$0xff] %vm1681, %v1754
      %1760 = vst.msk [vmem:[%s143 + $0x18] sm:$0xff] %vm1681, %v1756
      %1761 = vrot.lane.b32.xlu0 %v1647, 104
      %v1762 = vpop.permute.xlu0 %1761
      %1763 = vrot.lane.b32.xlu0 %v1650, 104
      %v1764 = vpop.permute.xlu0 %1763
      %1767 = vst.msk [vmem:[%s143 + $0x8] sm:$0xff] %vm1690, %v1762
      %1768 = vst.msk [vmem:[%s143 + $0x18] sm:$0xff] %vm1690, %v1764
      %1769 = vrot.lane.b32.xlu0 %v1647, 102
      %v1770 = vpop.permute.xlu0 %1769
      %1771 = vrot.lane.b32.xlu0 %v1650, 102
      %v1772 = vpop.permute.xlu0 %1771
      %1775 = vst.msk [vmem:[%s143 + $0x8] sm:$0xff] %vm1699, %v1770
      %1776 = vst.msk [vmem:[%s143 + $0x18] sm:$0xff] %vm1699, %v1772
      %1779 = vrot.lane.b32.xlu0 %v1647, 100
      %v1780 = vpop.permute.xlu0 %1779
      %1781 = vrot.lane.b32.xlu0 %v1648, 100
      %v1782 = vpop.permute.xlu0 %1781
      %1783 = vrot.lane.b32.xlu0 %v1650, 100
      %v1784 = vpop.permute.xlu0 %1783
      %1785 = vrot.lane.b32.xlu0 %v1651, 100
      %v1786 = vpop.permute.xlu0 %1785
      %vm1787 = vcmask 818176
      %v1788 = vsel %vm1787, %v1780, %v1782
      %v1789 = vsel %vm1787, %v1784, %v1786
      %1792 = vst.msk [vmem:[%s143 + $0x8] sm:$0xff] %vm1708, %v1788
      %1793 = vst.msk [vmem:[%s143 + $0x18] sm:$0xff] %vm1708, %v1789
      %1794 = vrot.lane.b32.xlu0 %v1648, 98
      %v1795 = vpop.permute.xlu0 %1794
      %1796 = vrot.lane.b32.xlu0 %v1651, 98
      %v1797 = vpop.permute.xlu0 %1796
      %1800 = vst.msk [vmem:[%s143 + $0x8] sm:$0xff] %vm1726, %v1795
      %1801 = vst.msk [vmem:[%s143 + $0x18] sm:$0xff] %vm1726, %v1797
      %p1802 = scmp.lt.s32.totalorder %s13, 1
      %s1803 = scalar_select %p1802, %s13, 1
      %s1804 = smul.addr %s1803, 4
      %s1805 = smul.addr %s1804, 8
      %s1806 = scalar_lea.vmem %s2, %s1805
      // Predicated region
      $region29: #{rrl_conv.1} parent=27 // pred_check
        %p1807 = pneg %p78
      $region30: #{rrl_conv.1} parent=27 // pred_check_branch
        %1809 = sbr.rel (%p1807) target = $region32
      $region31: #{rrl_conv.1} parent=27 // pred_region
        _
      $region32: #{rrl_conv.1} parent=27 // pred_fallthru
        _
    $region28: #{rrl_conv.1} parent=5 // pred_fallthru
      _
    %p1810 = scmp.le.s32.totalorder 2, %s8
    // Predicated region
    $region33: #{rrl_conv.1} parent=5 // pred_check
      %p1811 = pneg %p1810
    $region34: #{rrl_conv.1} parent=5 // pred_check_branch
      %1813 = sbr.rel (%p1811) target = $region36
    $region35: #{rrl_conv.1} parent=5 // pred_region
      %s1814 = ssub.s32 %s8, 2
      // Predicated region
      $region37: #{rrl_conv.1} parent=35 // pred_check
        %p1815 = pneg %p84
      $region38: #{rrl_conv.1} parent=35 // pred_check_branch
        %1817 = sbr.rel (%p1815) target = $region40
      $region39: #{rrl_conv.1} parent=35 // pred_region
        %p1818 = scmp.lt.s32.totalorder %s14, 1
        %s1819 = scalar_select %p1818, %s14, 1
        %s1820 = smul.addr %s1819, 4
        %s1821 = smul.addr %s1820, 8
        %s1822 = scalar_lea.vmem %s2, %s1821
      $region40: #{rrl_conv.1} parent=35 // pred_fallthru
        _
    $region36: #{rrl_conv.1} parent=5 // pred_fallthru
      _
  $region6: #{rrl_conv.1} parent=0 // loop_footer
    %s12 = sadd.s32 1, %s8
  $region7: #{rrl_conv.1} parent=0 // loop_footer_branch
    %7 = sbr.rel target = $region3
  $region8: #{rrl_conv.1} parent=0 // loop_exit
    _

</llo_original>
